<compile_context>
chip_gen: v5e
topology: v5e:2x2
jax: 0.10.0
libtpu: 0.0.40
codegen_flags: <defaults>
</compile_context>

<pallas_src>
import functools
import math

import jax
import jax.numpy as jnp
from jax import lax
from jax.experimental import pallas as pl
from jax.experimental.pallas import tpu as pltpu


# ----------------------------------------------------------------------------
# Helpers
# ----------------------------------------------------------------------------

def _const_spec(arr):
    """Whole-array BlockSpec, replicated across the grid, single-buffered."""
    ndim = arr.ndim
    index_map = lambda *_: (0,) * ndim
    try:
        return pl.BlockSpec(arr.shape, index_map, pipeline_mode=pl.Buffered(1))
    except Exception:  # pipeline_mode / Buffered unavailable -> default buffering
        return pl.BlockSpec(arr.shape, index_map)


def _pick_tile(n, target):
    """Largest multiple-of-8 divisor of n that is <= target (else n itself)."""
    if n <= target:
        return n
    t = (target // 8) * 8
    while t >= 8:
        if n % t == 0:
            return t
        t -= 8
    return n


# ----------------------------------------------------------------------------
# Kernels
# ----------------------------------------------------------------------------

def _make_attn_kernel(*, num_heads, head_dim, eps, add_pe, add_residual,
                      compute_dtype):
    """Fused (PE-add + QKV proj + flash MHA + out-proj + residual + LayerNorm).

    Grid: (batch, q_tiles, k_tiles).  v == k_src and residual == q_src, which
    holds for every attention layer inside TwoWayAttentionBlock.
    """
    f32 = jnp.float32
    cdt = compute_dtype
    H, dh = num_heads, head_dim
    scale = 1.0 / math.sqrt(dh)

    def kernel(*refs):
        if add_pe:
            (q_ref, qpe_ref, k_ref, kpe_ref,
             wq_ref, bq_ref, wk_ref, bk_ref, wv_ref, bv_ref, wo_ref, bo_ref,
             lnw_ref, lnb_ref, o_ref, qh_s, m_s, l_s, acc_s) = refs
        else:
            (q_ref, k_ref,
             wq_ref, bq_ref, wk_ref, bk_ref, wv_ref, bv_ref, wo_ref, bo_ref,
             lnw_ref, lnb_ref, o_ref, qh_s, m_s, l_s, acc_s) = refs
            qpe_ref = kpe_ref = None

        ki = pl.program_id(2)
        nk = pl.num_programs(2)

        # ---- once per (batch, q-tile): project Q, reset online-softmax state.
        @pl.when(ki == 0)
        def _init():
            q_in = q_ref[...]
            if add_pe:
                q_in = q_in + qpe_ref[...]
            qp = jnp.dot(q_in.astype(cdt), wq_ref[...].astype(cdt),
                         preferred_element_type=f32) + bq_ref[...].astype(f32)
            qp = qp * scale                       # fold 1/sqrt(dh) into Q
            for h in range(H):
                qh_s[h] = qp[:, h * dh:(h + 1) * dh].astype(qh_s.dtype)
            m_s[...] = jnp.full(m_s.shape, -jnp.inf, m_s.dtype)
            l_s[...] = jnp.zeros(l_s.shape, l_s.dtype)
            acc_s[...] = jnp.zeros(acc_s.shape, acc_s.dtype)

        # ---- every k-tile: project K/V (full MXU width), flash-update heads.
        k_in = k_ref[...]
        if add_pe:
            k_in = k_in + kpe_ref[...]
        kp = jnp.dot(k_in.astype(cdt), wk_ref[...].astype(cdt),
                     preferred_element_type=f32) + bk_ref[...].astype(f32)
        vp = jnp.dot(k_ref[...].astype(cdt), wv_ref[...].astype(cdt),
                     preferred_element_type=f32) + bv_ref[...].astype(f32)

        for h in range(H):
            lo = h * dh
            kh = kp[:, lo:lo + dh].astype(cdt)            # (tk, dh)
            vh = vp[:, lo:lo + dh].astype(cdt)            # (tk, dh)
            qh = qh_s[h]                                  # (tq, dh) pre-scaled
            logits = lax.dot_general(
                qh, kh, (((1,), (1,)), ((), ())),
                preferred_element_type=f32)               # (tq, tk)
            m_prev = m_s[h]
            m_new = jnp.maximum(m_prev,
                                jnp.max(logits, axis=-1, keepdims=True))
            alpha = jnp.exp(m_prev - m_new)
            p = jnp.exp(logits - m_new)
            l_s[h] = alpha * l_s[h] + jnp.sum(p, axis=-1, keepdims=True)
            acc_s[h] = alpha * acc_s[h] + jnp.dot(
                p.astype(cdt), vh, preferred_element_type=f32)
            m_s[h] = m_new

        # ---- once per (batch, q-tile): single full-depth out-proj + res + LN.
        @pl.when(ki == nk - 1)
        def _finalize():
            heads = []
            for h in range(H):
                inv_l = pl.reciprocal(l_s[h], approx=True)     # (tq, 1)
                heads.append(acc_s[h] * inv_l)                  # (tq, dh)
            attn = jnp.concatenate(heads, axis=-1)              # (tq, H*dh)
            out = jnp.dot(attn.astype(cdt), wo_ref[...].astype(cdt),
                          preferred_element_type=f32) + bo_ref[...].astype(f32)
            x = q_ref[...].astype(f32) + out if add_residual else out
            mu = jnp.mean(x, axis=-1, keepdims=True)
            xc = x - mu
            var = jnp.mean(xc * xc, axis=-1, keepdims=True)
            y = xc * lax.rsqrt(var + eps)
            o_ref[...] = (y * lnw_ref[...].astype(f32)
                          + lnb_ref[...].astype(f32)).astype(o_ref.dtype)

    return kernel


def _mlp_ln_kernel(x_ref, w1_ref, b1_ref, w2_ref, b2_ref, lnw_ref, lnb_ref,
                   o_ref, *, eps, compute_dtype):
    """Fused (lin1 + ReLU + lin2 + residual + LayerNorm) on a row tile."""
    f32 = jnp.float32
    cdt = compute_dtype
    x = x_ref[...]
    h = jnp.dot(x.astype(cdt), w1_ref[...].astype(cdt),
                preferred_element_type=f32) + b1_ref[...].astype(f32)
    h = jnp.maximum(h, 0.0)   # nn.ReLU (TwoWayAttentionBlock default activation)
    y = jnp.dot(h.astype(cdt), w2_ref[...].astype(cdt),
                preferred_element_type=f32) + b2_ref[...].astype(f32)
    z = x.astype(f32) + y
    mu = jnp.mean(z, axis=-1, keepdims=True)
    zc = z - mu
    var = jnp.mean(zc * zc, axis=-1, keepdims=True)
    o_ref[...] = ((zc * lax.rsqrt(var + eps)) * lnw_ref[...].astype(f32)
                  + lnb_ref[...].astype(f32)).astype(o_ref.dtype)


# ----------------------------------------------------------------------------
# Wrappers
# ----------------------------------------------------------------------------

_VMEM_LIMIT = 48 * 1024 * 1024  # sized for v7x's 64 MiB physical VMEM


def _attention_layer(q_src, k_src, q_pe, k_pe, attn_p, ln_p, *, num_heads,
                     add_pe, add_residual, eps, q_tile=512, k_tile=512,
                     compute_dtype=jnp.bfloat16):
    B, n_q, E = q_src.shape
    _, n_k, _ = k_src.shape
    D = attn_p["wq"].shape[1]
    assert D % num_heads == 0, "num_heads must divide internal_dim"
    dh = D // num_heads

    tq = _pick_tile(n_q, q_tile)
    tk = _pick_tile(n_k, k_tile)

    q_spec = pl.BlockSpec((None, tq, E), lambda b, qi, ki: (b, qi, 0))
    k_spec = pl.BlockSpec((None, tk, E), lambda b, qi, ki: (b, ki, 0))

    weights = (attn_p["wq"], attn_p["bq"], attn_p["wk"], attn_p["bk"],
               attn_p["wv"], attn_p["bv"], attn_p["wo"], attn_p["bo"],
               ln_p["w"], ln_p["b"])

    args, in_specs = [q_src], [q_spec]
    if add_pe:
        args.append(q_pe); in_specs.append(q_spec)
    args.append(k_src); in_specs.append(k_spec)
    if add_pe:
        args.append(k_pe); in_specs.append(k_spec)
    args += list(weights)
    in_specs += [_const_spec(w) for w in weights]

    kernel = _make_attn_kernel(num_heads=num_heads, head_dim=dh, eps=eps,
                               add_pe=add_pe, add_residual=add_residual,
                               compute_dtype=compute_dtype)

    return pl.pallas_call(
        kernel,
        out_shape=jax.ShapeDtypeStruct((B, n_q, E), q_src.dtype),
        grid_spec=pltpu.PrefetchScalarGridSpec(
            num_scalar_prefetch=0,
            grid=(B, n_q // tq, n_k // tk),
            in_specs=in_specs,
            out_specs=q_spec,
            scratch_shapes=[
                pltpu.VMEM((num_heads, tq, dh), compute_dtype),  # scaled Q heads
                pltpu.VMEM((num_heads, tq, 1), jnp.float32),     # running max
                pltpu.VMEM((num_heads, tq, 1), jnp.float32),     # running denom
                pltpu.VMEM((num_heads, tq, dh), jnp.float32),    # accumulator
            ]),
        compiler_params=pltpu.CompilerParams(
            dimension_semantics=("parallel", "parallel", "arbitrary"),
            vmem_limit_bytes=_VMEM_LIMIT),
    )(*args)


def _mlp_layer(x, mlp_p, ln_p, *, eps, row_tile=512,
               compute_dtype=jnp.bfloat16):
    B, N, E = x.shape
    R = B * N
    x2 = x.reshape(R, E)                 # contiguous view, no transpose
    tm = _pick_tile(R, row_tile)
    weights = (mlp_p["w1"], mlp_p["b1"], mlp_p["w2"], mlp_p["b2"],
               ln_p["w"], ln_p["b"])

    out = pl.pallas_call(
        functools.partial(_mlp_ln_kernel, eps=eps, compute_dtype=compute_dtype),
        out_shape=jax.ShapeDtypeStruct((R, E), x.dtype),
        grid_spec=pltpu.PrefetchScalarGridSpec(
            num_scalar_prefetch=0,
            grid=(R // tm,),
            in_specs=[pl.BlockSpec((tm, E), lambda i: (i, 0))]
                     + [_const_spec(w) for w in weights],
            out_specs=pl.BlockSpec((tm, E), lambda i: (i, 0)),
        ),
        compiler_params=pltpu.CompilerParams(
            dimension_semantics=("parallel",),
            vmem_limit_bytes=_VMEM_LIMIT),
    )(x2, *weights)
    return out.reshape(B, N, E)


def two_way_attention_block(queries, keys, query_pe, key_pe, params, *,
                            num_heads, skip_first_layer_pe=False, eps=1e-5,
                            compute_dtype=jnp.bfloat16):
    """Pallas implementation of TwoWayAttentionBlock.forward."""
    # (1) self-attention of sparse tokens (+ residual & norm1).
    #     v == k_src == queries, residual == q_src == queries.
    queries = _attention_layer(
        queries, queries, query_pe, query_pe,
        params["self_attn"], params["norm1"],
        num_heads=num_heads, add_pe=not skip_first_layer_pe,
        add_residual=not skip_first_layer_pe, eps=eps,
        compute_dtype=compute_dtype)
    # (2) cross-attention tokens -> image (+ residual & norm2).
    queries = _attention_layer(
        queries, keys, query_pe, key_pe,
        params["cross_t2i"], params["norm2"],
        num_heads=num_heads, add_pe=True, add_residual=True, eps=eps,
        compute_dtype=compute_dtype)
    # (3) MLP on sparse tokens (+ residual & norm3).
    queries = _mlp_layer(queries, params["mlp"], params["norm3"], eps=eps,
                         compute_dtype=compute_dtype)
    # (4) cross-attention image -> tokens (+ residual & norm4).
    keys = _attention_layer(
        keys, queries, key_pe, query_pe,
        params["cross_i2t"], params["norm4"],
        num_heads=num_heads, add_pe=True, add_residual=True, eps=eps,
        compute_dtype=compute_dtype)
    return queries, keys


# ----------------------------------------------------------------------------
# Pure-JAX reference (matches the PyTorch forward exactly)
# ----------------------------------------------------------------------------

def _attention_ref(q, k, v, p, num_heads):
    qp = q @ p["wq"] + p["bq"]
    kp = k @ p["wk"] + p["bk"]
    vp = v @ p["wv"] + p["bv"]
    b, n_q, d = qp.shape
    dh = d // num_heads

    def split(x):
        return x.reshape(x.shape[0], x.shape[1], num_heads, dh).transpose(0, 2, 1, 3)

    qh, kh, vh = split(qp), split(kp), split(vp)
    logits = jnp.einsum("bhqd,bhkd->bhqk", qh, kh) / math.sqrt(dh)
    a = jax.nn.softmax(logits, axis=-1)
    o = jnp.einsum("bhqk,bhkd->bhqd", a, vh)
    o = o.transpose(0, 2, 1, 3).reshape(b, n_q, d)
    return o @ p["wo"] + p["bo"]


def _layernorm_ref(x, w, b, eps):
    mu = jnp.mean(x, axis=-1, keepdims=True)
    var = jnp.mean((x - mu) ** 2, axis=-1, keepdims=True)
    return (x - mu) / jnp.sqrt(var + eps) * w + b


def _mlp_ref(x, p):
    return jnp.maximum(x @ p["w1"] + p["b1"], 0.0) @ p["w2"] + p["b2"]


def two_way_attention_block_ref(queries, keys, query_pe, key_pe, params, *,
                                num_heads, skip_first_layer_pe=False, eps=1e-5):
    if skip_first_layer_pe:
        queries = _attention_ref(queries, queries, queries,
                                 params["self_attn"], num_heads)
    else:
        q = queries + query_pe
        queries = queries + _attention_ref(q, q, queries,
                                           params["self_attn"], num_heads)
    queries = _layernorm_ref(queries, params["norm1"]["w"], params["norm1"]["b"], eps)
    q = queries + query_pe
    k = keys + key_pe
    queries = queries + _attention_ref(q, k, keys, params["cross_t2i"], num_heads)
    queries = _layernorm_ref(queries, params["norm2"]["w"], params["norm2"]["b"], eps)
    queries = queries + _mlp_ref(queries, params["mlp"])
    queries = _layernorm_ref(queries, params["norm3"]["w"], params["norm3"]["b"], eps)
    q = queries + query_pe
    k = keys + key_pe
    keys = keys + _attention_ref(k, q, queries, params["cross_i2t"], num_heads)
    keys = _layernorm_ref(keys, params["norm4"]["w"], params["norm4"]["b"], eps)
    return queries, keys


# ----------------------------------------------------------------------------
# Deterministic parameter init
# ----------------------------------------------------------------------------

def _init_linear(key, d_in, d_out):
    kw, kb = jax.random.split(key)
    w = jax.random.normal(kw, (d_in, d_out), jnp.float32) / math.sqrt(d_in)
    b = 0.02 * jax.random.normal(kb, (1, d_out), jnp.float32)
    return w, b


def _init_attention(key, emb_dim, internal_dim):
    ks = jax.random.split(key, 4)
    wq, bq = _init_linear(ks[0], emb_dim, internal_dim)
    wk, bk = _init_linear(ks[1], emb_dim, internal_dim)
    wv, bv = _init_linear(ks[2], emb_dim, internal_dim)
    wo, bo = _init_linear(ks[3], internal_dim, emb_dim)
    return dict(wq=wq, bq=bq, wk=wk, bk=bk, wv=wv, bv=bv, wo=wo, bo=bo)


def _init_layernorm(key, dim):
    kw, kb = jax.random.split(key)
    return dict(w=1.0 + 0.1 * jax.random.normal(kw, (1, dim), jnp.float32),
                b=0.05 * jax.random.normal(kb, (1, dim), jnp.float32))


def _init_mlp(key, emb_dim, mlp_dim):
    k1, k2 = jax.random.split(key)
    w1, b1 = _init_linear(k1, emb_dim, mlp_dim)
    w2, b2 = _init_linear(k2, mlp_dim, emb_dim)
    return dict(w1=w1, b1=b1, w2=w2, b2=b2)


if __name__ == "__main__":
    key = jax.random.PRNGKey(0)

    B = 2
    emb_dim = 32
    num_heads = 4
    mlp_dim = 64
    downsample_rate = 2     # cross-attention internal dim = 16 (head dim 4)
    n_tokens = 8            # sparse queries
    n_image = 64            # dense keys (e.g. 8x8 image tokens)

    ks = jax.random.split(key, 12)
    queries = jax.random.normal(ks[0], (B, n_tokens, emb_dim), jnp.float32)
    keys_x = jax.random.normal(ks[1], (B, n_image, emb_dim), jnp.float32)
    query_pe = jax.random.normal(ks[2], (B, n_tokens, emb_dim), jnp.float32)
    key_pe = jax.random.normal(ks[3], (B, n_image, emb_dim), jnp.float32)

    params = {
        "self_attn": _init_attention(ks[4], emb_dim, emb_dim),
        "cross_t2i": _init_attention(ks[5], emb_dim, emb_dim // downsample_rate),
        "cross_i2t": _init_attention(ks[6], emb_dim, emb_dim // downsample_rate),
        "mlp": _init_mlp(ks[7], emb_dim, mlp_dim),
        "norm1": _init_layernorm(ks[8], emb_dim),
        "norm2": _init_layernorm(ks[9], emb_dim),
        "norm3": _init_layernorm(ks[10], emb_dim),
        "norm4": _init_layernorm(ks[11], emb_dim),
    }

    for skip in (False, True):
        q_out, k_out = two_way_attention_block(
            queries, keys_x, query_pe, key_pe, params,
            num_heads=num_heads, skip_first_layer_pe=skip)
        q_out = jax.block_until_ready(q_out)
        k_out = jax.block_until_ready(k_out)

        q_ref, k_ref = two_way_attention_block_ref(
            queries, keys_x, query_pe, key_pe, params,
            num_heads=num_heads, skip_first_layer_pe=skip)

        assert q_out.shape == (B, n_tokens, emb_dim)
        assert k_out.shape == (B, n_image, emb_dim)
        # Tolerance covers bf16 MXU operands (f32 accumulation) vs. the f32
        # XLA reference; structural errors are orders of magnitude larger.
        assert jnp.allclose(q_out, q_ref, atol=5e-2, rtol=5e-2), \
            (skip, float(jnp.max(jnp.abs(q_out - q_ref))))
        assert jnp.allclose(k_out, k_ref, atol=5e-2, rtol=5e-2), \
            (skip, float(jnp.max(jnp.abs(k_out - k_ref))))

    print("KERNEL_OK")
</pallas_src>

<mosaic_0001>
module attributes {stable_mosaic.version = 11 : i64} {
  func.func @kernel(%arg0: i32, %arg1: i32, %arg2: i32, %arg3: memref<1x8x32xf32, #tpu.memory_space<vmem>>, %arg4: memref<1x8x32xf32, #tpu.memory_space<vmem>>, %arg5: memref<1x8x32xf32, #tpu.memory_space<vmem>>, %arg6: memref<1x8x32xf32, #tpu.memory_space<vmem>>, %arg7: memref<32x32xf32, #tpu.memory_space<vmem>>, %arg8: memref<1x32xf32, #tpu.memory_space<vmem>>, %arg9: memref<32x32xf32, #tpu.memory_space<vmem>>, %arg10: memref<1x32xf32, #tpu.memory_space<vmem>>, %arg11: memref<32x32xf32, #tpu.memory_space<vmem>>, %arg12: memref<1x32xf32, #tpu.memory_space<vmem>>, %arg13: memref<32x32xf32, #tpu.memory_space<vmem>>, %arg14: memref<1x32xf32, #tpu.memory_space<vmem>>, %arg15: memref<1x32xf32, #tpu.memory_space<vmem>>, %arg16: memref<1x32xf32, #tpu.memory_space<vmem>>, %arg17: memref<1x8x32xf32, #tpu.memory_space<vmem>>, %arg18: memref<4x8x8xbf16, #tpu.memory_space<vmem>>, %arg19: memref<4x8x1xf32, #tpu.memory_space<vmem>>, %arg20: memref<4x8x1xf32, #tpu.memory_space<vmem>>, %arg21: memref<4x8x8xf32, #tpu.memory_space<vmem>>) attributes {dimension_semantics = [#tpu.dimension_semantics<parallel>, #tpu.dimension_semantics<parallel>, #tpu.dimension_semantics<arbitrary>], iteration_bounds = array<i64: 2, 1, 1>, scalar_prefetch = 0 : i64, scratch_operands = 4 : i64, tpu.core_type = #tpu.core_type<tc>, window_params = [{transform_indices = @transform_0, window_bounds = array<i64: 1, 8, 32>}, {transform_indices = @transform_1, window_bounds = array<i64: 1, 8, 32>}, {transform_indices = @transform_2, window_bounds = array<i64: 1, 8, 32>}, {transform_indices = @transform_3, window_bounds = array<i64: 1, 8, 32>}, {pipeline_mode = #tpu.pipeline_mode<synchronous>, transform_indices = @transform_4, window_bounds = array<i64: 32, 32>}, {pipeline_mode = #tpu.pipeline_mode<synchronous>, transform_indices = @transform_5, window_bounds = array<i64: 1, 32>}, {pipeline_mode = #tpu.pipeline_mode<synchronous>, transform_indices = @transform_6, window_bounds = array<i64: 32, 32>}, {pipeline_mode = #tpu.pipeline_mode<synchronous>, transform_indices = @transform_7, window_bounds = array<i64: 1, 32>}, {pipeline_mode = #tpu.pipeline_mode<synchronous>, transform_indices = @transform_8, window_bounds = array<i64: 32, 32>}, {pipeline_mode = #tpu.pipeline_mode<synchronous>, transform_indices = @transform_9, window_bounds = array<i64: 1, 32>}, {pipeline_mode = #tpu.pipeline_mode<synchronous>, transform_indices = @transform_10, window_bounds = array<i64: 32, 32>}, {pipeline_mode = #tpu.pipeline_mode<synchronous>, transform_indices = @transform_11, window_bounds = array<i64: 1, 32>}, {pipeline_mode = #tpu.pipeline_mode<synchronous>, transform_indices = @transform_12, window_bounds = array<i64: 1, 32>}, {pipeline_mode = #tpu.pipeline_mode<synchronous>, transform_indices = @transform_13, window_bounds = array<i64: 1, 32>}, {transform_indices = @transform_14, window_bounds = array<i64: 1, 8, 32>}]} {
    %c0_i32 = arith.constant 0 : i32
    %0 = arith.cmpi eq, %arg2, %c0_i32 : i32
    %1 = arith.extui %0 : i1 to i32
    %c0_i32_0 = arith.constant 0 : i32
    %2 = arith.cmpi ne, %1, %c0_i32_0 : i32
    scf.if %2 {
      %c0_117 = arith.constant 0 : index
      %c0_118 = arith.constant 0 : index
      %c0_119 = arith.constant 0 : index
      %183 = vector.load %arg3[%c0_117, %c0_118, %c0_119] : memref<1x8x32xf32, #tpu.memory_space<vmem>>, vector<1x8x32xf32>
      %184 = vector.shape_cast %183 : vector<1x8x32xf32> to vector<8x32xf32>
      %c0_120 = arith.constant 0 : index
      %c0_121 = arith.constant 0 : index
      %c0_122 = arith.constant 0 : index
      %185 = vector.load %arg4[%c0_120, %c0_121, %c0_122] : memref<1x8x32xf32, #tpu.memory_space<vmem>>, vector<1x8x32xf32>
      %186 = vector.shape_cast %185 : vector<1x8x32xf32> to vector<8x32xf32>
      %187 = arith.addf %184, %186 : vector<8x32xf32>
      %188 = arith.truncf %187 : vector<8x32xf32> to vector<8x32xbf16>
      %c0_123 = arith.constant 0 : index
      %c0_124 = arith.constant 0 : index
      %189 = vector.load %arg7[%c0_123, %c0_124] : memref<32x32xf32, #tpu.memory_space<vmem>>, vector<32x32xf32>
      %190 = arith.truncf %189 : vector<32x32xf32> to vector<32x32xbf16>
      %cst_125 = arith.constant dense<0.000000e+00> : vector<8x32xf32>
      %191 = tpu.matmul %188, %190, %cst_125 {dimension_numbers = #tpu.dot_dimension_numbers<[1], [0], [0], [1], [0, 0, 1, 1], [], []>} : vector<8x32xbf16>, vector<32x32xbf16>, vector<8x32xf32> -> vector<8x32xf32>
      %c0_126 = arith.constant 0 : index
      %c0_127 = arith.constant 0 : index
      %192 = vector.load %arg8[%c0_126, %c0_127] : memref<1x32xf32, #tpu.memory_space<vmem>>, vector<1x32xf32>
      %193 = vector.broadcast %192 : vector<1x32xf32> to vector<8x32xf32>
      %194 = arith.addf %191, %193 : vector<8x32xf32>
      %cst_128 = arith.constant 0.353553385 : f32
      %195 = vector.broadcast %cst_128 : f32 to vector<8x32xf32>
      %196 = arith.mulf %194, %195 : vector<8x32xf32>
      %197 = vector.extract_strided_slice %196 {offsets = [0, 0], sizes = [8, 8], strides = [1, 1]} : vector<8x32xf32> to vector<8x8xf32>
      %198 = arith.truncf %197 : vector<8x8xf32> to vector<8x8xbf16>
      %c0_129 = arith.constant 0 : index
      %c0_130 = arith.constant 0 : index
      %c0_131 = arith.constant 0 : index
      %199 = vector.load %arg18[%c0_129, %c0_130, %c0_131] : memref<4x8x8xbf16, #tpu.memory_space<vmem>>, vector<1x8x8xbf16>
      %200 = vector.shape_cast %199 : vector<1x8x8xbf16> to vector<8x8xbf16>
      %201 = vector.shape_cast %198 : vector<8x8xbf16> to vector<1x8x8xbf16>
      tpu.vector_store %arg18[%c0_129, %c0_130, %c0_131], %201 {strides = array<i32>} : memref<4x8x8xbf16, #tpu.memory_space<vmem>>, vector<1x8x8xbf16>,
      %202 = vector.extract_strided_slice %196 {offsets = [0, 8], sizes = [8, 8], strides = [1, 1]} : vector<8x32xf32> to vector<8x8xf32>
      %203 = arith.truncf %202 : vector<8x8xf32> to vector<8x8xbf16>
      %c1_132 = arith.constant 1 : index
      %c0_133 = arith.constant 0 : index
      %c0_134 = arith.constant 0 : index
      %204 = vector.load %arg18[%c1_132, %c0_133, %c0_134] : memref<4x8x8xbf16, #tpu.memory_space<vmem>>, vector<1x8x8xbf16>
      %205 = vector.shape_cast %204 : vector<1x8x8xbf16> to vector<8x8xbf16>
      %206 = vector.shape_cast %203 : vector<8x8xbf16> to vector<1x8x8xbf16>
      tpu.vector_store %arg18[%c1_132, %c0_133, %c0_134], %206 {strides = array<i32>} : memref<4x8x8xbf16, #tpu.memory_space<vmem>>, vector<1x8x8xbf16>,
      %207 = vector.extract_strided_slice %196 {offsets = [0, 16], sizes = [8, 8], strides = [1, 1]} : vector<8x32xf32> to vector<8x8xf32>
      %208 = arith.truncf %207 : vector<8x8xf32> to vector<8x8xbf16>
      %c2_135 = arith.constant 2 : index
      %c0_136 = arith.constant 0 : index
      %c0_137 = arith.constant 0 : index
      %209 = vector.load %arg18[%c2_135, %c0_136, %c0_137] : memref<4x8x8xbf16, #tpu.memory_space<vmem>>, vector<1x8x8xbf16>
      %210 = vector.shape_cast %209 : vector<1x8x8xbf16> to vector<8x8xbf16>
      %211 = vector.shape_cast %208 : vector<8x8xbf16> to vector<1x8x8xbf16>
      tpu.vector_store %arg18[%c2_135, %c0_136, %c0_137], %211 {strides = array<i32>} : memref<4x8x8xbf16, #tpu.memory_space<vmem>>, vector<1x8x8xbf16>,
      %212 = vector.extract_strided_slice %196 {offsets = [0, 24], sizes = [8, 8], strides = [1, 1]} : vector<8x32xf32> to vector<8x8xf32>
      %213 = arith.truncf %212 : vector<8x8xf32> to vector<8x8xbf16>
      %c3_138 = arith.constant 3 : index
      %c0_139 = arith.constant 0 : index
      %c0_140 = arith.constant 0 : index
      %214 = vector.load %arg18[%c3_138, %c0_139, %c0_140] : memref<4x8x8xbf16, #tpu.memory_space<vmem>>, vector<1x8x8xbf16>
      %215 = vector.shape_cast %214 : vector<1x8x8xbf16> to vector<8x8xbf16>
      %216 = vector.shape_cast %213 : vector<8x8xbf16> to vector<1x8x8xbf16>
      tpu.vector_store %arg18[%c3_138, %c0_139, %c0_140], %216 {strides = array<i32>} : memref<4x8x8xbf16, #tpu.memory_space<vmem>>, vector<1x8x8xbf16>,
      %cst_141 = arith.constant 0xFF800000 : f32
      %217 = vector.broadcast %cst_141 : f32 to vector<4x8x1xf32>
      %c0_142 = arith.constant 0 : index
      %c0_143 = arith.constant 0 : index
      %c0_144 = arith.constant 0 : index
      %218 = vector.load %arg19[%c0_142, %c0_143, %c0_144] : memref<4x8x1xf32, #tpu.memory_space<vmem>>, vector<4x8x1xf32>
      tpu.vector_store %arg19[%c0_142, %c0_143, %c0_144], %217 {strides = array<i32>} : memref<4x8x1xf32, #tpu.memory_space<vmem>>, vector<4x8x1xf32>,
      %cst_145 = arith.constant 0.000000e+00 : f32
      %219 = vector.broadcast %cst_145 : f32 to vector<4x8x1xf32>
      %c0_146 = arith.constant 0 : index
      %c0_147 = arith.constant 0 : index
      %c0_148 = arith.constant 0 : index
      %220 = vector.load %arg20[%c0_146, %c0_147, %c0_148] : memref<4x8x1xf32, #tpu.memory_space<vmem>>, vector<4x8x1xf32>
      tpu.vector_store %arg20[%c0_146, %c0_147, %c0_148], %219 {strides = array<i32>} : memref<4x8x1xf32, #tpu.memory_space<vmem>>, vector<4x8x1xf32>,
      %cst_149 = arith.constant 0.000000e+00 : f32
      %221 = vector.broadcast %cst_149 : f32 to vector<4x8x8xf32>
      %c0_150 = arith.constant 0 : index
      %c0_151 = arith.constant 0 : index
      %c0_152 = arith.constant 0 : index
      %222 = vector.load %arg21[%c0_150, %c0_151, %c0_152] : memref<4x8x8xf32, #tpu.memory_space<vmem>>, vector<4x8x8xf32>
      tpu.vector_store %arg21[%c0_150, %c0_151, %c0_152], %221 {strides = array<i32>} : memref<4x8x8xf32, #tpu.memory_space<vmem>>, vector<4x8x8xf32>,
    } else {
    }
    %c0 = arith.constant 0 : index
    %c0_1 = arith.constant 0 : index
    %c0_2 = arith.constant 0 : index
    %3 = vector.load %arg5[%c0, %c0_1, %c0_2] : memref<1x8x32xf32, #tpu.memory_space<vmem>>, vector<1x8x32xf32>
    %4 = vector.shape_cast %3 : vector<1x8x32xf32> to vector<8x32xf32>
    %c0_3 = arith.constant 0 : index
    %c0_4 = arith.constant 0 : index
    %c0_5 = arith.constant 0 : index
    %5 = vector.load %arg6[%c0_3, %c0_4, %c0_5] : memref<1x8x32xf32, #tpu.memory_space<vmem>>, vector<1x8x32xf32>
    %6 = vector.shape_cast %5 : vector<1x8x32xf32> to vector<8x32xf32>
    %7 = arith.addf %4, %6 : vector<8x32xf32>
    %8 = arith.truncf %7 : vector<8x32xf32> to vector<8x32xbf16>
    %c0_6 = arith.constant 0 : index
    %c0_7 = arith.constant 0 : index
    %9 = vector.load %arg9[%c0_6, %c0_7] : memref<32x32xf32, #tpu.memory_space<vmem>>, vector<32x32xf32>
    %10 = arith.truncf %9 : vector<32x32xf32> to vector<32x32xbf16>
    %cst = arith.constant dense<0.000000e+00> : vector<8x32xf32>
    %11 = tpu.matmul %8, %10, %cst {dimension_numbers = #tpu.dot_dimension_numbers<[1], [0], [0], [1], [0, 0, 1, 1], [], []>} : vector<8x32xbf16>, vector<32x32xbf16>, vector<8x32xf32> -> vector<8x32xf32>
    %c0_8 = arith.constant 0 : index
    %c0_9 = arith.constant 0 : index
    %12 = vector.load %arg10[%c0_8, %c0_9] : memref<1x32xf32, #tpu.memory_space<vmem>>, vector<1x32xf32>
    %13 = vector.broadcast %12 : vector<1x32xf32> to vector<8x32xf32>
    %14 = arith.addf %11, %13 : vector<8x32xf32>
    %c0_10 = arith.constant 0 : index
    %c0_11 = arith.constant 0 : index
    %c0_12 = arith.constant 0 : index
    %15 = vector.load %arg5[%c0_10, %c0_11, %c0_12] : memref<1x8x32xf32, #tpu.memory_space<vmem>>, vector<1x8x32xf32>
    %16 = vector.shape_cast %15 : vector<1x8x32xf32> to vector<8x32xf32>
    %17 = arith.truncf %16 : vector<8x32xf32> to vector<8x32xbf16>
    %c0_13 = arith.constant 0 : index
    %c0_14 = arith.constant 0 : index
    %18 = vector.load %arg11[%c0_13, %c0_14] : memref<32x32xf32, #tpu.memory_space<vmem>>, vector<32x32xf32>
    %19 = arith.truncf %18 : vector<32x32xf32> to vector<32x32xbf16>
    %cst_15 = arith.constant dense<0.000000e+00> : vector<8x32xf32>
    %20 = tpu.matmul %17, %19, %cst_15 {dimension_numbers = #tpu.dot_dimension_numbers<[1], [0], [0], [1], [0, 0, 1, 1], [], []>} : vector<8x32xbf16>, vector<32x32xbf16>, vector<8x32xf32> -> vector<8x32xf32>
    %c0_16 = arith.constant 0 : index
    %c0_17 = arith.constant 0 : index
    %21 = vector.load %arg12[%c0_16, %c0_17] : memref<1x32xf32, #tpu.memory_space<vmem>>, vector<1x32xf32>
    %22 = vector.broadcast %21 : vector<1x32xf32> to vector<8x32xf32>
    %23 = arith.addf %20, %22 : vector<8x32xf32>
    %24 = vector.extract_strided_slice %14 {offsets = [0, 0], sizes = [8, 8], strides = [1, 1]} : vector<8x32xf32> to vector<8x8xf32>
    %25 = arith.truncf %24 : vector<8x8xf32> to vector<8x8xbf16>
    %26 = vector.extract_strided_slice %23 {offsets = [0, 0], sizes = [8, 8], strides = [1, 1]} : vector<8x32xf32> to vector<8x8xf32>
    %27 = arith.truncf %26 : vector<8x8xf32> to vector<8x8xbf16>
    %c0_18 = arith.constant 0 : index
    %c0_19 = arith.constant 0 : index
    %c0_20 = arith.constant 0 : index
    %28 = vector.load %arg18[%c0_18, %c0_19, %c0_20] : memref<4x8x8xbf16, #tpu.memory_space<vmem>>, vector<1x8x8xbf16>
    %29 = vector.shape_cast %28 : vector<1x8x8xbf16> to vector<8x8xbf16>
    %cst_21 = arith.constant dense<0.000000e+00> : vector<8x8xf32>
    %30 = tpu.matmul %29, %25, %cst_21 {dimension_numbers = #tpu.dot_dimension_numbers<[1], [1], [0], [0], [0, 0, 1, 0], [], []>} : vector<8x8xbf16>, vector<8x8xbf16>, vector<8x8xf32> -> vector<8x8xf32>
    %c0_22 = arith.constant 0 : index
    %c0_23 = arith.constant 0 : index
    %c0_24 = arith.constant 0 : index
    %31 = vector.load %arg19[%c0_22, %c0_23, %c0_24] : memref<4x8x1xf32, #tpu.memory_space<vmem>>, vector<1x8x1xf32>
    %32 = vector.shape_cast %31 : vector<1x8x1xf32> to vector<8x1xf32>
    %cst_25 = arith.constant dense<0xFF800000> : vector<8xf32>
    %33 = vector.multi_reduction <maximumf>, %30, %cst_25 [1] : vector<8x8xf32> to vector<8xf32>
    %34 = vector.shape_cast %33 : vector<8xf32> to vector<8x1xf32>
    %35 = arith.maximumf %32, %34 : vector<8x1xf32>
    %36 = arith.subf %32, %35 : vector<8x1xf32>
    %37 = math.exp %36 : vector<8x1xf32>
    %38 = vector.broadcast %35 : vector<8x1xf32> to vector<8x8xf32>
    %39 = arith.subf %30, %38 : vector<8x8xf32>
    %40 = math.exp %39 : vector<8x8xf32>
    %c0_26 = arith.constant 0 : index
    %c0_27 = arith.constant 0 : index
    %c0_28 = arith.constant 0 : index
    %41 = vector.load %arg20[%c0_26, %c0_27, %c0_28] : memref<4x8x1xf32, #tpu.memory_space<vmem>>, vector<1x8x1xf32>
    %42 = vector.shape_cast %41 : vector<1x8x1xf32> to vector<8x1xf32>
    %43 = arith.mulf %37, %42 : vector<8x1xf32>
    %cst_29 = arith.constant dense<0.000000e+00> : vector<8xf32>
    %44 = vector.multi_reduction <add>, %40, %cst_29 [1] : vector<8x8xf32> to vector<8xf32>
    %45 = vector.shape_cast %44 : vector<8xf32> to vector<8x1xf32>
    %46 = arith.addf %43, %45 : vector<8x1xf32>
    %c0_30 = arith.constant 0 : index
    %c0_31 = arith.constant 0 : index
    %c0_32 = arith.constant 0 : index
    %47 = vector.load %arg20[%c0_30, %c0_31, %c0_32] : memref<4x8x1xf32, #tpu.memory_space<vmem>>, vector<1x8x1xf32>
    %48 = vector.shape_cast %47 : vector<1x8x1xf32> to vector<8x1xf32>
    %49 = vector.shape_cast %46 : vector<8x1xf32> to vector<1x8x1xf32>
    tpu.vector_store %arg20[%c0_30, %c0_31, %c0_32], %49 {strides = array<i32>} : memref<4x8x1xf32, #tpu.memory_space<vmem>>, vector<1x8x1xf32>,
    %c0_33 = arith.constant 0 : index
    %c0_34 = arith.constant 0 : index
    %c0_35 = arith.constant 0 : index
    %50 = vector.load %arg21[%c0_33, %c0_34, %c0_35] : memref<4x8x8xf32, #tpu.memory_space<vmem>>, vector<1x8x8xf32>
    %51 = vector.shape_cast %50 : vector<1x8x8xf32> to vector<8x8xf32>
    %52 = vector.broadcast %37 : vector<8x1xf32> to vector<8x8xf32>
    %53 = arith.mulf %52, %51 : vector<8x8xf32>
    %54 = arith.truncf %40 : vector<8x8xf32> to vector<8x8xbf16>
    %cst_36 = arith.constant dense<0.000000e+00> : vector<8x8xf32>
    %55 = tpu.matmul %54, %27, %cst_36 {dimension_numbers = #tpu.dot_dimension_numbers<[1], [0], [0], [1], [0, 0, 1, 1], [], []>} : vector<8x8xbf16>, vector<8x8xbf16>, vector<8x8xf32> -> vector<8x8xf32>
    %56 = arith.addf %53, %55 : vector<8x8xf32>
    %c0_37 = arith.constant 0 : index
    %c0_38 = arith.constant 0 : index
    %c0_39 = arith.constant 0 : index
    %57 = vector.load %arg21[%c0_37, %c0_38, %c0_39] : memref<4x8x8xf32, #tpu.memory_space<vmem>>, vector<1x8x8xf32>
    %58 = vector.shape_cast %57 : vector<1x8x8xf32> to vector<8x8xf32>
    %59 = vector.shape_cast %56 : vector<8x8xf32> to vector<1x8x8xf32>
    tpu.vector_store %arg21[%c0_37, %c0_38, %c0_39], %59 {strides = array<i32>} : memref<4x8x8xf32, #tpu.memory_space<vmem>>, vector<1x8x8xf32>,
    %c0_40 = arith.constant 0 : index
    %c0_41 = arith.constant 0 : index
    %c0_42 = arith.constant 0 : index
    %60 = vector.load %arg19[%c0_40, %c0_41, %c0_42] : memref<4x8x1xf32, #tpu.memory_space<vmem>>, vector<1x8x1xf32>
    %61 = vector.shape_cast %60 : vector<1x8x1xf32> to vector<8x1xf32>
    %62 = vector.shape_cast %35 : vector<8x1xf32> to vector<1x8x1xf32>
    tpu.vector_store %arg19[%c0_40, %c0_41, %c0_42], %62 {strides = array<i32>} : memref<4x8x1xf32, #tpu.memory_space<vmem>>, vector<1x8x1xf32>,
    %63 = vector.extract_strided_slice %14 {offsets = [0, 8], sizes = [8, 8], strides = [1, 1]} : vector<8x32xf32> to vector<8x8xf32>
    %64 = arith.truncf %63 : vector<8x8xf32> to vector<8x8xbf16>
    %65 = vector.extract_strided_slice %23 {offsets = [0, 8], sizes = [8, 8], strides = [1, 1]} : vector<8x32xf32> to vector<8x8xf32>
    %66 = arith.truncf %65 : vector<8x8xf32> to vector<8x8xbf16>
    %c1 = arith.constant 1 : index
    %c0_43 = arith.constant 0 : index
    %c0_44 = arith.constant 0 : index
    %67 = vector.load %arg18[%c1, %c0_43, %c0_44] : memref<4x8x8xbf16, #tpu.memory_space<vmem>>, vector<1x8x8xbf16>
    %68 = vector.shape_cast %67 : vector<1x8x8xbf16> to vector<8x8xbf16>
    %cst_45 = arith.constant dense<0.000000e+00> : vector<8x8xf32>
    %69 = tpu.matmul %68, %64, %cst_45 {dimension_numbers = #tpu.dot_dimension_numbers<[1], [1], [0], [0], [0, 0, 1, 0], [], []>} : vector<8x8xbf16>, vector<8x8xbf16>, vector<8x8xf32> -> vector<8x8xf32>
    %c1_46 = arith.constant 1 : index
    %c0_47 = arith.constant 0 : index
    %c0_48 = arith.constant 0 : index
    %70 = vector.load %arg19[%c1_46, %c0_47, %c0_48] : memref<4x8x1xf32, #tpu.memory_space<vmem>>, vector<1x8x1xf32>
    %71 = vector.shape_cast %70 : vector<1x8x1xf32> to vector<8x1xf32>
    %cst_49 = arith.constant dense<0xFF800000> : vector<8xf32>
    %72 = vector.multi_reduction <maximumf>, %69, %cst_49 [1] : vector<8x8xf32> to vector<8xf32>
    %73 = vector.shape_cast %72 : vector<8xf32> to vector<8x1xf32>
    %74 = arith.maximumf %71, %73 : vector<8x1xf32>
    %75 = arith.subf %71, %74 : vector<8x1xf32>
    %76 = math.exp %75 : vector<8x1xf32>
    %77 = vector.broadcast %74 : vector<8x1xf32> to vector<8x8xf32>
    %78 = arith.subf %69, %77 : vector<8x8xf32>
    %79 = math.exp %78 : vector<8x8xf32>
    %c1_50 = arith.constant 1 : index
    %c0_51 = arith.constant 0 : index
    %c0_52 = arith.constant 0 : index
    %80 = vector.load %arg20[%c1_50, %c0_51, %c0_52] : memref<4x8x1xf32, #tpu.memory_space<vmem>>, vector<1x8x1xf32>
    %81 = vector.shape_cast %80 : vector<1x8x1xf32> to vector<8x1xf32>
    %82 = arith.mulf %76, %81 : vector<8x1xf32>
    %cst_53 = arith.constant dense<0.000000e+00> : vector<8xf32>
    %83 = vector.multi_reduction <add>, %79, %cst_53 [1] : vector<8x8xf32> to vector<8xf32>
    %84 = vector.shape_cast %83 : vector<8xf32> to vector<8x1xf32>
    %85 = arith.addf %82, %84 : vector<8x1xf32>
    %c1_54 = arith.constant 1 : index
    %c0_55 = arith.constant 0 : index
    %c0_56 = arith.constant 0 : index
    %86 = vector.load %arg20[%c1_54, %c0_55, %c0_56] : memref<4x8x1xf32, #tpu.memory_space<vmem>>, vector<1x8x1xf32>
    %87 = vector.shape_cast %86 : vector<1x8x1xf32> to vector<8x1xf32>
    %88 = vector.shape_cast %85 : vector<8x1xf32> to vector<1x8x1xf32>
    tpu.vector_store %arg20[%c1_54, %c0_55, %c0_56], %88 {strides = array<i32>} : memref<4x8x1xf32, #tpu.memory_space<vmem>>, vector<1x8x1xf32>,
    %c1_57 = arith.constant 1 : index
    %c0_58 = arith.constant 0 : index
    %c0_59 = arith.constant 0 : index
    %89 = vector.load %arg21[%c1_57, %c0_58, %c0_59] : memref<4x8x8xf32, #tpu.memory_space<vmem>>, vector<1x8x8xf32>
    %90 = vector.shape_cast %89 : vector<1x8x8xf32> to vector<8x8xf32>
    %91 = vector.broadcast %76 : vector<8x1xf32> to vector<8x8xf32>
    %92 = arith.mulf %91, %90 : vector<8x8xf32>
    %93 = arith.truncf %79 : vector<8x8xf32> to vector<8x8xbf16>
    %cst_60 = arith.constant dense<0.000000e+00> : vector<8x8xf32>
    %94 = tpu.matmul %93, %66, %cst_60 {dimension_numbers = #tpu.dot_dimension_numbers<[1], [0], [0], [1], [0, 0, 1, 1], [], []>} : vector<8x8xbf16>, vector<8x8xbf16>, vector<8x8xf32> -> vector<8x8xf32>
    %95 = arith.addf %92, %94 : vector<8x8xf32>
    %c1_61 = arith.constant 1 : index
    %c0_62 = arith.constant 0 : index
    %c0_63 = arith.constant 0 : index
    %96 = vector.load %arg21[%c1_61, %c0_62, %c0_63] : memref<4x8x8xf32, #tpu.memory_space<vmem>>, vector<1x8x8xf32>
    %97 = vector.shape_cast %96 : vector<1x8x8xf32> to vector<8x8xf32>
    %98 = vector.shape_cast %95 : vector<8x8xf32> to vector<1x8x8xf32>
    tpu.vector_store %arg21[%c1_61, %c0_62, %c0_63], %98 {strides = array<i32>} : memref<4x8x8xf32, #tpu.memory_space<vmem>>, vector<1x8x8xf32>,
    %c1_64 = arith.constant 1 : index
    %c0_65 = arith.constant 0 : index
    %c0_66 = arith.constant 0 : index
    %99 = vector.load %arg19[%c1_64, %c0_65, %c0_66] : memref<4x8x1xf32, #tpu.memory_space<vmem>>, vector<1x8x1xf32>
    %100 = vector.shape_cast %99 : vector<1x8x1xf32> to vector<8x1xf32>
    %101 = vector.shape_cast %74 : vector<8x1xf32> to vector<1x8x1xf32>
    tpu.vector_store %arg19[%c1_64, %c0_65, %c0_66], %101 {strides = array<i32>} : memref<4x8x1xf32, #tpu.memory_space<vmem>>, vector<1x8x1xf32>,
    %102 = vector.extract_strided_slice %14 {offsets = [0, 16], sizes = [8, 8], strides = [1, 1]} : vector<8x32xf32> to vector<8x8xf32>
    %103 = arith.truncf %102 : vector<8x8xf32> to vector<8x8xbf16>
    %104 = vector.extract_strided_slice %23 {offsets = [0, 16], sizes = [8, 8], strides = [1, 1]} : vector<8x32xf32> to vector<8x8xf32>
    %105 = arith.truncf %104 : vector<8x8xf32> to vector<8x8xbf16>
    %c2 = arith.constant 2 : index
    %c0_67 = arith.constant 0 : index
    %c0_68 = arith.constant 0 : index
    %106 = vector.load %arg18[%c2, %c0_67, %c0_68] : memref<4x8x8xbf16, #tpu.memory_space<vmem>>, vector<1x8x8xbf16>
    %107 = vector.shape_cast %106 : vector<1x8x8xbf16> to vector<8x8xbf16>
    %cst_69 = arith.constant dense<0.000000e+00> : vector<8x8xf32>
    %108 = tpu.matmul %107, %103, %cst_69 {dimension_numbers = #tpu.dot_dimension_numbers<[1], [1], [0], [0], [0, 0, 1, 0], [], []>} : vector<8x8xbf16>, vector<8x8xbf16>, vector<8x8xf32> -> vector<8x8xf32>
    %c2_70 = arith.constant 2 : index
    %c0_71 = arith.constant 0 : index
    %c0_72 = arith.constant 0 : index
    %109 = vector.load %arg19[%c2_70, %c0_71, %c0_72] : memref<4x8x1xf32, #tpu.memory_space<vmem>>, vector<1x8x1xf32>
    %110 = vector.shape_cast %109 : vector<1x8x1xf32> to vector<8x1xf32>
    %cst_73 = arith.constant dense<0xFF800000> : vector<8xf32>
    %111 = vector.multi_reduction <maximumf>, %108, %cst_73 [1] : vector<8x8xf32> to vector<8xf32>
    %112 = vector.shape_cast %111 : vector<8xf32> to vector<8x1xf32>
    %113 = arith.maximumf %110, %112 : vector<8x1xf32>
    %114 = arith.subf %110, %113 : vector<8x1xf32>
    %115 = math.exp %114 : vector<8x1xf32>
    %116 = vector.broadcast %113 : vector<8x1xf32> to vector<8x8xf32>
    %117 = arith.subf %108, %116 : vector<8x8xf32>
    %118 = math.exp %117 : vector<8x8xf32>
    %c2_74 = arith.constant 2 : index
    %c0_75 = arith.constant 0 : index
    %c0_76 = arith.constant 0 : index
    %119 = vector.load %arg20[%c2_74, %c0_75, %c0_76] : memref<4x8x1xf32, #tpu.memory_space<vmem>>, vector<1x8x1xf32>
    %120 = vector.shape_cast %119 : vector<1x8x1xf32> to vector<8x1xf32>
    %121 = arith.mulf %115, %120 : vector<8x1xf32>
    %cst_77 = arith.constant dense<0.000000e+00> : vector<8xf32>
    %122 = vector.multi_reduction <add>, %118, %cst_77 [1] : vector<8x8xf32> to vector<8xf32>
    %123 = vector.shape_cast %122 : vector<8xf32> to vector<8x1xf32>
    %124 = arith.addf %121, %123 : vector<8x1xf32>
    %c2_78 = arith.constant 2 : index
    %c0_79 = arith.constant 0 : index
    %c0_80 = arith.constant 0 : index
    %125 = vector.load %arg20[%c2_78, %c0_79, %c0_80] : memref<4x8x1xf32, #tpu.memory_space<vmem>>, vector<1x8x1xf32>
    %126 = vector.shape_cast %125 : vector<1x8x1xf32> to vector<8x1xf32>
    %127 = vector.shape_cast %124 : vector<8x1xf32> to vector<1x8x1xf32>
    tpu.vector_store %arg20[%c2_78, %c0_79, %c0_80], %127 {strides = array<i32>} : memref<4x8x1xf32, #tpu.memory_space<vmem>>, vector<1x8x1xf32>,
    %c2_81 = arith.constant 2 : index
    %c0_82 = arith.constant 0 : index
    %c0_83 = arith.constant 0 : index
    %128 = vector.load %arg21[%c2_81, %c0_82, %c0_83] : memref<4x8x8xf32, #tpu.memory_space<vmem>>, vector<1x8x8xf32>
    %129 = vector.shape_cast %128 : vector<1x8x8xf32> to vector<8x8xf32>
    %130 = vector.broadcast %115 : vector<8x1xf32> to vector<8x8xf32>
    %131 = arith.mulf %130, %129 : vector<8x8xf32>
    %132 = arith.truncf %118 : vector<8x8xf32> to vector<8x8xbf16>
    %cst_84 = arith.constant dense<0.000000e+00> : vector<8x8xf32>
    %133 = tpu.matmul %132, %105, %cst_84 {dimension_numbers = #tpu.dot_dimension_numbers<[1], [0], [0], [1], [0, 0, 1, 1], [], []>} : vector<8x8xbf16>, vector<8x8xbf16>, vector<8x8xf32> -> vector<8x8xf32>
    %134 = arith.addf %131, %133 : vector<8x8xf32>
    %c2_85 = arith.constant 2 : index
    %c0_86 = arith.constant 0 : index
    %c0_87 = arith.constant 0 : index
    %135 = vector.load %arg21[%c2_85, %c0_86, %c0_87] : memref<4x8x8xf32, #tpu.memory_space<vmem>>, vector<1x8x8xf32>
    %136 = vector.shape_cast %135 : vector<1x8x8xf32> to vector<8x8xf32>
    %137 = vector.shape_cast %134 : vector<8x8xf32> to vector<1x8x8xf32>
    tpu.vector_store %arg21[%c2_85, %c0_86, %c0_87], %137 {strides = array<i32>} : memref<4x8x8xf32, #tpu.memory_space<vmem>>, vector<1x8x8xf32>,
    %c2_88 = arith.constant 2 : index
    %c0_89 = arith.constant 0 : index
    %c0_90 = arith.constant 0 : index
    %138 = vector.load %arg19[%c2_88, %c0_89, %c0_90] : memref<4x8x1xf32, #tpu.memory_space<vmem>>, vector<1x8x1xf32>
    %139 = vector.shape_cast %138 : vector<1x8x1xf32> to vector<8x1xf32>
    %140 = vector.shape_cast %113 : vector<8x1xf32> to vector<1x8x1xf32>
    tpu.vector_store %arg19[%c2_88, %c0_89, %c0_90], %140 {strides = array<i32>} : memref<4x8x1xf32, #tpu.memory_space<vmem>>, vector<1x8x1xf32>,
    %141 = vector.extract_strided_slice %14 {offsets = [0, 24], sizes = [8, 8], strides = [1, 1]} : vector<8x32xf32> to vector<8x8xf32>
    %142 = arith.truncf %141 : vector<8x8xf32> to vector<8x8xbf16>
    %143 = vector.extract_strided_slice %23 {offsets = [0, 24], sizes = [8, 8], strides = [1, 1]} : vector<8x32xf32> to vector<8x8xf32>
    %144 = arith.truncf %143 : vector<8x8xf32> to vector<8x8xbf16>
    %c3 = arith.constant 3 : index
    %c0_91 = arith.constant 0 : index
    %c0_92 = arith.constant 0 : index
    %145 = vector.load %arg18[%c3, %c0_91, %c0_92] : memref<4x8x8xbf16, #tpu.memory_space<vmem>>, vector<1x8x8xbf16>
    %146 = vector.shape_cast %145 : vector<1x8x8xbf16> to vector<8x8xbf16>
    %cst_93 = arith.constant dense<0.000000e+00> : vector<8x8xf32>
    %147 = tpu.matmul %146, %142, %cst_93 {dimension_numbers = #tpu.dot_dimension_numbers<[1], [1], [0], [0], [0, 0, 1, 0], [], []>} : vector<8x8xbf16>, vector<8x8xbf16>, vector<8x8xf32> -> vector<8x8xf32>
    %c3_94 = arith.constant 3 : index
    %c0_95 = arith.constant 0 : index
    %c0_96 = arith.constant 0 : index
    %148 = vector.load %arg19[%c3_94, %c0_95, %c0_96] : memref<4x8x1xf32, #tpu.memory_space<vmem>>, vector<1x8x1xf32>
    %149 = vector.shape_cast %148 : vector<1x8x1xf32> to vector<8x1xf32>
    %cst_97 = arith.constant dense<0xFF800000> : vector<8xf32>
    %150 = vector.multi_reduction <maximumf>, %147, %cst_97 [1] : vector<8x8xf32> to vector<8xf32>
    %151 = vector.shape_cast %150 : vector<8xf32> to vector<8x1xf32>
    %152 = arith.maximumf %149, %151 : vector<8x1xf32>
    %153 = arith.subf %149, %152 : vector<8x1xf32>
    %154 = math.exp %153 : vector<8x1xf32>
    %155 = vector.broadcast %152 : vector<8x1xf32> to vector<8x8xf32>
    %156 = arith.subf %147, %155 : vector<8x8xf32>
    %157 = math.exp %156 : vector<8x8xf32>
    %c3_98 = arith.constant 3 : index
    %c0_99 = arith.constant 0 : index
    %c0_100 = arith.constant 0 : index
    %158 = vector.load %arg20[%c3_98, %c0_99, %c0_100] : memref<4x8x1xf32, #tpu.memory_space<vmem>>, vector<1x8x1xf32>
    %159 = vector.shape_cast %158 : vector<1x8x1xf32> to vector<8x1xf32>
    %160 = arith.mulf %154, %159 : vector<8x1xf32>
    %cst_101 = arith.constant dense<0.000000e+00> : vector<8xf32>
    %161 = vector.multi_reduction <add>, %157, %cst_101 [1] : vector<8x8xf32> to vector<8xf32>
    %162 = vector.shape_cast %161 : vector<8xf32> to vector<8x1xf32>
    %163 = arith.addf %160, %162 : vector<8x1xf32>
    %c3_102 = arith.constant 3 : index
    %c0_103 = arith.constant 0 : index
    %c0_104 = arith.constant 0 : index
    %164 = vector.load %arg20[%c3_102, %c0_103, %c0_104] : memref<4x8x1xf32, #tpu.memory_space<vmem>>, vector<1x8x1xf32>
    %165 = vector.shape_cast %164 : vector<1x8x1xf32> to vector<8x1xf32>
    %166 = vector.shape_cast %163 : vector<8x1xf32> to vector<1x8x1xf32>
    tpu.vector_store %arg20[%c3_102, %c0_103, %c0_104], %166 {strides = array<i32>} : memref<4x8x1xf32, #tpu.memory_space<vmem>>, vector<1x8x1xf32>,
    %c3_105 = arith.constant 3 : index
    %c0_106 = arith.constant 0 : index
    %c0_107 = arith.constant 0 : index
    %167 = vector.load %arg21[%c3_105, %c0_106, %c0_107] : memref<4x8x8xf32, #tpu.memory_space<vmem>>, vector<1x8x8xf32>
    %168 = vector.shape_cast %167 : vector<1x8x8xf32> to vector<8x8xf32>
    %169 = vector.broadcast %154 : vector<8x1xf32> to vector<8x8xf32>
    %170 = arith.mulf %169, %168 : vector<8x8xf32>
    %171 = arith.truncf %157 : vector<8x8xf32> to vector<8x8xbf16>
    %cst_108 = arith.constant dense<0.000000e+00> : vector<8x8xf32>
    %172 = tpu.matmul %171, %144, %cst_108 {dimension_numbers = #tpu.dot_dimension_numbers<[1], [0], [0], [1], [0, 0, 1, 1], [], []>} : vector<8x8xbf16>, vector<8x8xbf16>, vector<8x8xf32> -> vector<8x8xf32>
    %173 = arith.addf %170, %172 : vector<8x8xf32>
    %c3_109 = arith.constant 3 : index
    %c0_110 = arith.constant 0 : index
    %c0_111 = arith.constant 0 : index
    %174 = vector.load %arg21[%c3_109, %c0_110, %c0_111] : memref<4x8x8xf32, #tpu.memory_space<vmem>>, vector<1x8x8xf32>
    %175 = vector.shape_cast %174 : vector<1x8x8xf32> to vector<8x8xf32>
    %176 = vector.shape_cast %173 : vector<8x8xf32> to vector<1x8x8xf32>
    tpu.vector_store %arg21[%c3_109, %c0_110, %c0_111], %176 {strides = array<i32>} : memref<4x8x8xf32, #tpu.memory_space<vmem>>, vector<1x8x8xf32>,
    %c3_112 = arith.constant 3 : index
    %c0_113 = arith.constant 0 : index
    %c0_114 = arith.constant 0 : index
    %177 = vector.load %arg19[%c3_112, %c0_113, %c0_114] : memref<4x8x1xf32, #tpu.memory_space<vmem>>, vector<1x8x1xf32>
    %178 = vector.shape_cast %177 : vector<1x8x1xf32> to vector<8x1xf32>
    %179 = vector.shape_cast %152 : vector<8x1xf32> to vector<1x8x1xf32>
    tpu.vector_store %arg19[%c3_112, %c0_113, %c0_114], %179 {strides = array<i32>} : memref<4x8x1xf32, #tpu.memory_space<vmem>>, vector<1x8x1xf32>,
    %c0_i32_115 = arith.constant 0 : i32
    %180 = arith.cmpi eq, %arg2, %c0_i32_115 : i32
    %181 = arith.extui %180 : i1 to i32
    %c0_i32_116 = arith.constant 0 : i32
    %182 = arith.cmpi ne, %181, %c0_i32_116 : i32
    scf.if %182 {
      %c0_117 = arith.constant 0 : index
      %c0_118 = arith.constant 0 : index
      %c0_119 = arith.constant 0 : index
      %183 = vector.load %arg20[%c0_117, %c0_118, %c0_119] : memref<4x8x1xf32, #tpu.memory_space<vmem>>, vector<1x8x1xf32>
      %184 = vector.shape_cast %183 : vector<1x8x1xf32> to vector<8x1xf32>
      %185 = tpu.reciprocal %184 {approx = true} : vector<8x1xf32> -> vector<8x1xf32>
      %c0_120 = arith.constant 0 : index
      %c0_121 = arith.constant 0 : index
      %c0_122 = arith.constant 0 : index
      %186 = vector.load %arg21[%c0_120, %c0_121, %c0_122] : memref<4x8x8xf32, #tpu.memory_space<vmem>>, vector<1x8x8xf32>
      %187 = vector.shape_cast %186 : vector<1x8x8xf32> to vector<8x8xf32>
      %188 = vector.broadcast %185 : vector<8x1xf32> to vector<8x8xf32>
      %189 = arith.mulf %187, %188 : vector<8x8xf32>
      %c1_123 = arith.constant 1 : index
      %c0_124 = arith.constant 0 : index
      %c0_125 = arith.constant 0 : index
      %190 = vector.load %arg20[%c1_123, %c0_124, %c0_125] : memref<4x8x1xf32, #tpu.memory_space<vmem>>, vector<1x8x1xf32>
      %191 = vector.shape_cast %190 : vector<1x8x1xf32> to vector<8x1xf32>
      %192 = tpu.reciprocal %191 {approx = true} : vector<8x1xf32> -> vector<8x1xf32>
      %c1_126 = arith.constant 1 : index
      %c0_127 = arith.constant 0 : index
      %c0_128 = arith.constant 0 : index
      %193 = vector.load %arg21[%c1_126, %c0_127, %c0_128] : memref<4x8x8xf32, #tpu.memory_space<vmem>>, vector<1x8x8xf32>
      %194 = vector.shape_cast %193 : vector<1x8x8xf32> to vector<8x8xf32>
      %195 = vector.broadcast %192 : vector<8x1xf32> to vector<8x8xf32>
      %196 = arith.mulf %194, %195 : vector<8x8xf32>
      %c2_129 = arith.constant 2 : index
      %c0_130 = arith.constant 0 : index
      %c0_131 = arith.constant 0 : index
      %197 = vector.load %arg20[%c2_129, %c0_130, %c0_131] : memref<4x8x1xf32, #tpu.memory_space<vmem>>, vector<1x8x1xf32>
      %198 = vector.shape_cast %197 : vector<1x8x1xf32> to vector<8x1xf32>
      %199 = tpu.reciprocal %198 {approx = true} : vector<8x1xf32> -> vector<8x1xf32>
      %c2_132 = arith.constant 2 : index
      %c0_133 = arith.constant 0 : index
      %c0_134 = arith.constant 0 : index
      %200 = vector.load %arg21[%c2_132, %c0_133, %c0_134] : memref<4x8x8xf32, #tpu.memory_space<vmem>>, vector<1x8x8xf32>
      %201 = vector.shape_cast %200 : vector<1x8x8xf32> to vector<8x8xf32>
      %202 = vector.broadcast %199 : vector<8x1xf32> to vector<8x8xf32>
      %203 = arith.mulf %201, %202 : vector<8x8xf32>
      %c3_135 = arith.constant 3 : index
      %c0_136 = arith.constant 0 : index
      %c0_137 = arith.constant 0 : index
      %204 = vector.load %arg20[%c3_135, %c0_136, %c0_137] : memref<4x8x1xf32, #tpu.memory_space<vmem>>, vector<1x8x1xf32>
      %205 = vector.shape_cast %204 : vector<1x8x1xf32> to vector<8x1xf32>
      %206 = tpu.reciprocal %205 {approx = true} : vector<8x1xf32> -> vector<8x1xf32>
      %c3_138 = arith.constant 3 : index
      %c0_139 = arith.constant 0 : index
      %c0_140 = arith.constant 0 : index
      %207 = vector.load %arg21[%c3_138, %c0_139, %c0_140] : memref<4x8x8xf32, #tpu.memory_space<vmem>>, vector<1x8x8xf32>
      %208 = vector.shape_cast %207 : vector<1x8x8xf32> to vector<8x8xf32>
      %209 = vector.broadcast %206 : vector<8x1xf32> to vector<8x8xf32>
      %210 = arith.mulf %208, %209 : vector<8x8xf32>
      %211 = tpu.concatenate %189, %196, %203, %210 in 1 : vector<8x8xf32>, vector<8x8xf32>, vector<8x8xf32>, vector<8x8xf32> -> vector<8x32xf32>
      %212 = arith.truncf %211 : vector<8x32xf32> to vector<8x32xbf16>
      %c0_141 = arith.constant 0 : index
      %c0_142 = arith.constant 0 : index
      %213 = vector.load %arg13[%c0_141, %c0_142] : memref<32x32xf32, #tpu.memory_space<vmem>>, vector<32x32xf32>
      %214 = arith.truncf %213 : vector<32x32xf32> to vector<32x32xbf16>
      %cst_143 = arith.constant dense<0.000000e+00> : vector<8x32xf32>
      %215 = tpu.matmul %212, %214, %cst_143 {dimension_numbers = #tpu.dot_dimension_numbers<[1], [0], [0], [1], [0, 0, 1, 1], [], []>} : vector<8x32xbf16>, vector<32x32xbf16>, vector<8x32xf32> -> vector<8x32xf32>
      %c0_144 = arith.constant 0 : index
      %c0_145 = arith.constant 0 : index
      %216 = vector.load %arg14[%c0_144, %c0_145] : memref<1x32xf32, #tpu.memory_space<vmem>>, vector<1x32xf32>
      %217 = vector.broadcast %216 : vector<1x32xf32> to vector<8x32xf32>
      %218 = arith.addf %215, %217 : vector<8x32xf32>
      %c0_146 = arith.constant 0 : index
      %c0_147 = arith.constant 0 : index
      %c0_148 = arith.constant 0 : index
      %219 = vector.load %arg3[%c0_146, %c0_147, %c0_148] : memref<1x8x32xf32, #tpu.memory_space<vmem>>, vector<1x8x32xf32>
      %220 = vector.shape_cast %219 : vector<1x8x32xf32> to vector<8x32xf32>
      %221 = arith.addf %220, %218 : vector<8x32xf32>
      %cst_149 = arith.constant dense<0.000000e+00> : vector<8xf32>
      %222 = vector.multi_reduction <add>, %221, %cst_149 [1] : vector<8x32xf32> to vector<8xf32>
      %223 = vector.shape_cast %222 : vector<8xf32> to vector<8x1xf32>
      %cst_150 = arith.constant 3.200000e+01 : f32
      %224 = vector.broadcast %cst_150 : f32 to vector<8x1xf32>
      %225 = arith.divf %223, %224 : vector<8x1xf32>
      %226 = vector.broadcast %225 : vector<8x1xf32> to vector<8x32xf32>
      %227 = arith.subf %221, %226 : vector<8x32xf32>
      %228 = arith.mulf %227, %227 : vector<8x32xf32>
      %cst_151 = arith.constant dense<0.000000e+00> : vector<8xf32>
      %229 = vector.multi_reduction <add>, %228, %cst_151 [1] : vector<8x32xf32> to vector<8xf32>
      %230 = vector.shape_cast %229 : vector<8xf32> to vector<8x1xf32>
      %cst_152 = arith.constant 3.200000e+01 : f32
      %231 = vector.broadcast %cst_152 : f32 to vector<8x1xf32>
      %232 = arith.divf %230, %231 : vector<8x1xf32>
      %cst_153 = arith.constant 9.99999974E-6 : f32
      %233 = vector.broadcast %cst_153 : f32 to vector<8x1xf32>
      %234 = arith.addf %232, %233 : vector<8x1xf32>
      %235 = math.rsqrt %234 : vector<8x1xf32>
      %236 = vector.broadcast %235 : vector<8x1xf32> to vector<8x32xf32>
      %237 = arith.mulf %227, %236 : vector<8x32xf32>
      %c0_154 = arith.constant 0 : index
      %c0_155 = arith.constant 0 : index
      %238 = vector.load %arg15[%c0_154, %c0_155] : memref<1x32xf32, #tpu.memory_space<vmem>>, vector<1x32xf32>
      %239 = vector.broadcast %238 : vector<1x32xf32> to vector<8x32xf32>
      %240 = arith.mulf %237, %239 : vector<8x32xf32>
      %c0_156 = arith.constant 0 : index
      %c0_157 = arith.constant 0 : index
      %241 = vector.load %arg16[%c0_156, %c0_157] : memref<1x32xf32, #tpu.memory_space<vmem>>, vector<1x32xf32>
      %242 = vector.broadcast %241 : vector<1x32xf32> to vector<8x32xf32>
      %243 = arith.addf %240, %242 : vector<8x32xf32>
      %c0_158 = arith.constant 0 : index
      %c0_159 = arith.constant 0 : index
      %c0_160 = arith.constant 0 : index
      %244 = vector.load %arg17[%c0_158, %c0_159, %c0_160] : memref<1x8x32xf32, #tpu.memory_space<vmem>>, vector<1x8x32xf32>
      %245 = vector.shape_cast %244 : vector<1x8x32xf32> to vector<8x32xf32>
      %246 = vector.shape_cast %243 : vector<8x32xf32> to vector<1x8x32xf32>
      tpu.vector_store %arg17[%c0_158, %c0_159, %c0_160], %246 {strides = array<i32>} : memref<1x8x32xf32, #tpu.memory_space<vmem>>, vector<1x8x32xf32>,
    } else {
    }
    return
  }
  func.func @transform_0(%arg0: i32, %arg1: i32, %arg2: i32) -> (i32, i32, i32) {
    %c0_i32 = arith.constant 0 : i32
    %c0_i32_0 = arith.constant 0 : i32
    return %arg0, %arg1, %c0_i32 : i32, i32, i32
  }
  func.func @transform_1(%arg0: i32, %arg1: i32, %arg2: i32) -> (i32, i32, i32) {
    %c0_i32 = arith.constant 0 : i32
    %c0_i32_0 = arith.constant 0 : i32
    return %arg0, %arg1, %c0_i32 : i32, i32, i32
  }
  func.func @transform_2(%arg0: i32, %arg1: i32, %arg2: i32) -> (i32, i32, i32) {
    %c0_i32 = arith.constant 0 : i32
    %c0_i32_0 = arith.constant 0 : i32
    return %arg0, %arg2, %c0_i32 : i32, i32, i32
  }
  func.func @transform_3(%arg0: i32, %arg1: i32, %arg2: i32) -> (i32, i32, i32) {
    %c0_i32 = arith.constant 0 : i32
    %c0_i32_0 = arith.constant 0 : i32
    return %arg0, %arg2, %c0_i32 : i32, i32, i32
  }
  func.func @transform_4(%arg0: i32, %arg1: i32, %arg2: i32) -> (i32, i32) {
    %c0_i32 = arith.constant 0 : i32
    %c0_i32_0 = arith.constant 0 : i32
    %c0_i32_1 = arith.constant 0 : i32
    return %c0_i32, %c0_i32_0 : i32, i32
  }
  func.func @transform_5(%arg0: i32, %arg1: i32, %arg2: i32) -> (i32, i32) {
    %c0_i32 = arith.constant 0 : i32
    %c0_i32_0 = arith.constant 0 : i32
    %c0_i32_1 = arith.constant 0 : i32
    return %c0_i32, %c0_i32_0 : i32, i32
  }
  func.func @transform_6(%arg0: i32, %arg1: i32, %arg2: i32) -> (i32, i32) {
    %c0_i32 = arith.constant 0 : i32
    %c0_i32_0 = arith.constant 0 : i32
    %c0_i32_1 = arith.constant 0 : i32
    return %c0_i32, %c0_i32_0 : i32, i32
  }
  func.func @transform_7(%arg0: i32, %arg1: i32, %arg2: i32) -> (i32, i32) {
    %c0_i32 = arith.constant 0 : i32
    %c0_i32_0 = arith.constant 0 : i32
    %c0_i32_1 = arith.constant 0 : i32
    return %c0_i32, %c0_i32_0 : i32, i32
  }
  func.func @transform_8(%arg0: i32, %arg1: i32, %arg2: i32) -> (i32, i32) {
    %c0_i32 = arith.constant 0 : i32
    %c0_i32_0 = arith.constant 0 : i32
    %c0_i32_1 = arith.constant 0 : i32
    return %c0_i32, %c0_i32_0 : i32, i32
  }
  func.func @transform_9(%arg0: i32, %arg1: i32, %arg2: i32) -> (i32, i32) {
    %c0_i32 = arith.constant 0 : i32
    %c0_i32_0 = arith.constant 0 : i32
    %c0_i32_1 = arith.constant 0 : i32
    return %c0_i32, %c0_i32_0 : i32, i32
  }
  func.func @transform_10(%arg0: i32, %arg1: i32, %arg2: i32) -> (i32, i32) {
    %c0_i32 = arith.constant 0 : i32
    %c0_i32_0 = arith.constant 0 : i32
    %c0_i32_1 = arith.constant 0 : i32
    return %c0_i32, %c0_i32_0 : i32, i32
  }
  func.func @transform_11(%arg0: i32, %arg1: i32, %arg2: i32) -> (i32, i32) {
    %c0_i32 = arith.constant 0 : i32
    %c0_i32_0 = arith.constant 0 : i32
    %c0_i32_1 = arith.constant 0 : i32
    return %c0_i32, %c0_i32_0 : i32, i32
  }
  func.func @transform_12(%arg0: i32, %arg1: i32, %arg2: i32) -> (i32, i32) {
    %c0_i32 = arith.constant 0 : i32
    %c0_i32_0 = arith.constant 0 : i32
    %c0_i32_1 = arith.constant 0 : i32
    return %c0_i32, %c0_i32_0 : i32, i32
  }
  func.func @transform_13(%arg0: i32, %arg1: i32, %arg2: i32) -> (i32, i32) {
    %c0_i32 = arith.constant 0 : i32
    %c0_i32_0 = arith.constant 0 : i32
    %c0_i32_1 = arith.constant 0 : i32
    return %c0_i32, %c0_i32_0 : i32, i32
  }
  func.func @transform_14(%arg0: i32, %arg1: i32, %arg2: i32) -> (i32, i32, i32) {
    %c0_i32 = arith.constant 0 : i32
    %c0_i32_0 = arith.constant 0 : i32
    return %arg0, %arg1, %c0_i32 : i32, i32, i32
  }
}

</mosaic_0001>

<llo_original>
// kernel: tpu_custom_call.1
$region0: #{tpu_custom_call.1}
  #allocation0 [shape = 'u32[]', space=smem, size = 0x4, offset = 0x4, fixed_abs, tag = 'smem constant byte address 0x4 - core index']
  #allocation1 [shape = 'u32[72,128]{1,0:T(1,128)}', space=vmem, size = 0x9000, scoped, tag = 'internal scratch']
  #allocation2 [shape = 'bf16[4,8,8]{2,1,0:T(8,128)(2,1)}', space=vmem, size = 0x2000, scoped, tag = 'scratch operand']
  #allocation3 [shape = 'f32[4,8,1]{2,1,0:T(8,128)}', space=vmem, size = 0x4000, scoped, tag = 'scratch operand']
  #allocation4 [shape = 'f32[4,8,1]{2,1,0:T(8,128)}', space=vmem, size = 0x4000, scoped, tag = 'scratch operand']
  #allocation5 [shape = 'f32[4,8,8]{2,1,0:T(8,128)}', space=vmem, size = 0x4000, scoped, tag = 'scratch operand']
  %s0 = inlined_call_operand.hbm [shape: f32[2,8,32], index: 0, kind: input, shape index: {}]
  %s1 = inlined_call_operand.hbm [shape: f32[2,8,32], index: 1, kind: input, shape index: {}]
  %s2 = inlined_call_operand.hbm [shape: f32[2,8,32], index: 2, kind: input, shape index: {}]
  %s3 = inlined_call_operand.hbm [shape: f32[2,8,32], index: 3, kind: input, shape index: {}]
  %s4 = inlined_call_operand.hbm [shape: f32[32,32], index: 4, kind: input, shape index: {}]
  %s5 = inlined_call_operand.vmem [shape: f32[1,32], index: 5, kind: input, shape index: {}]
  %s6 = inlined_call_operand.hbm [shape: f32[32,32], index: 6, kind: input, shape index: {}]
  %s7 = inlined_call_operand.vmem [shape: f32[1,32], index: 7, kind: input, shape index: {}]
  %s8 = inlined_call_operand.hbm [shape: f32[32,32], index: 8, kind: input, shape index: {}]
  %s9 = inlined_call_operand.vmem [shape: f32[1,32], index: 9, kind: input, shape index: {}]
  %s10 = inlined_call_operand.hbm [shape: f32[32,32], index: 10, kind: input, shape index: {}]
  %s11 = inlined_call_operand.vmem [shape: f32[1,32], index: 11, kind: input, shape index: {}]
  %s12 = inlined_call_operand.vmem [shape: f32[1,32], index: 12, kind: input, shape index: {}]
  %s13 = inlined_call_operand.vmem [shape: f32[1,32], index: 13, kind: input, shape index: {}]
  %s14 = inlined_call_operand.hbm [shape: f32[2,8,32], index: 14, kind: output, shape index: {}]
  %s15 = sld [smem:[#allocation0]]
  $region129: #{tpu_custom_call.1} parent=0
    _
  %s17 = ssub.s32 1, %s15
  %s18 = scalar_select 0, %s17, %s15
  $region1: #{tpu_custom_call.1} parent=0
    #allocation6 [shape = 'u8[8192]{0}', space=vmem, size = 0x2000, scoped, tag = 'input window, operand 0']
    #allocation7 [shape = 's32[2]{0}', space=sflag, size = 0x8, scoped, tag = 'scoped memory for tpu_custom_call.1']
    #allocation8 [shape = 's32[2]{0}', space=sflag, size = 0x8, scoped, tag = 'scoped memory for tpu_custom_call.1']
    #allocation9 [shape = 'u8[8192]{0}', space=vmem, size = 0x2000, scoped, tag = 'input window, operand 1']
    #allocation10 [shape = 's32[2]{0}', space=sflag, size = 0x8, scoped, tag = 'scoped memory for tpu_custom_call.1']
    #allocation11 [shape = 'u8[8192]{0}', space=vmem, size = 0x2000, scoped, tag = 'input window, operand 2']
    #allocation12 [shape = 'u8[8192]{0}', space=vmem, size = 0x2000, scoped, tag = 'input window, operand 3']
    #allocation13 [shape = 's32[2]{0}', space=sflag, size = 0x8, scoped, tag = 'scoped memory for tpu_custom_call.1']
    #allocation14 [shape = 'u8[16384]{0}', space=vmem, size = 0x4000, scoped, tag = 'input window, operand 4, single buffered']
    #allocation15 [shape = 'u8[16384]{0}', space=vmem, size = 0x4000, scoped, tag = 'input window, operand 6, single buffered']
    #allocation16 [shape = 's32[1]{0}', space=sflag, size = 0x4, scoped, tag = 'scoped memory for tpu_custom_call.1']
    #allocation17 [shape = 'u8[16384]{0}', space=vmem, size = 0x4000, scoped, tag = 'input window, operand 8, single buffered']
    #allocation18 [shape = 'u8[16384]{0}', space=vmem, size = 0x4000, scoped, tag = 'input window, operand 10, single buffered']
    #allocation19 [shape = 's32[1]{0}', space=sflag, size = 0x4, scoped, tag = 'scoped memory for tpu_custom_call.1']
    #allocation20 [shape = 'u8[8192]{0}', space=vmem, size = 0x2000, scoped, tag = 'output window, operand 0']
    %19 = vsyncpa [#allocation7], 0
    %s20 = scalar_lea.sflag [#allocation7], 1
    %21 = vsyncpa %s20, 0
    %22 = vsyncpa [#allocation10], 0
    %s23 = scalar_lea.sflag [#allocation10], 1
    %24 = vsyncpa %s23, 0
    %25 = vsyncpa [#allocation13], 0
    %s26 = scalar_lea.sflag [#allocation13], 1
    %27 = vsyncpa %s26, 0
    %28 = vsyncpa [#allocation16], 0
    %29 = vsyncpa [#allocation19], 0
    %30 = vsyncpa [#allocation8], 0
    %s31 = scalar_lea.sflag [#allocation8], 1
    %32 = vsyncpa %s31, 0
    loop: start=0, step=1, limit=4
    $region2: #{tpu_custom_call.1} parent=1 // loop_pre_header
      _
    $region3: #{tpu_custom_call.1} parent=1 // loop_header
      %s34 = sphi 0, %s38
      %p35 = scmp.ge.s32.totalorder %s34, 4
      %s41 = sphi 0, %s60
      %s42 = sphi 0, %s56
      %s43 = sphi 0, %s52
      %s44 = sphi 0, %s41
      %s45 = sphi 0, %s42
      %s46 = sphi 0, %s43
      %s47 = sphi 0, %s44
      %s48 = sphi 0, %s45
      %s49 = sphi 0, %s46
      %s65 = sphi 0, %s67
      %s68 = sphi 0, %s65
      %s69 = sphi 0, %s68
      %s85 = sphi 0, %s69
      %s93 = sphi 0, %s95
      %s96 = sphi 0, %s93
      %s97 = sphi 0, %s96
      %s113 = sphi 0, %s97
      %s121 = sphi 0, %s123
      %s124 = sphi 0, %s121
      %s125 = sphi 0, %s124
      %s141 = sphi 0, %s125
      %s149 = sphi 0, %s151
      %s152 = sphi 0, %s149
      %s153 = sphi 0, %s152
      %s169 = sphi 0, %s153
      %s173 = sphi 0, %s173
      %s175 = sphi 0, %s173
      %s176 = sphi 0, %s175
      %s190 = sphi 0, %s176
      %s194 = sphi 0, %s194
      %s196 = sphi 0, %s194
      %s197 = sphi 0, %s196
      %s211 = sphi 0, %s197
      %s215 = sphi 0, %s215
      %s217 = sphi 0, %s215
      %s218 = sphi 0, %s217
      %s232 = sphi 0, %s218
      %s236 = sphi 0, %s236
      %s238 = sphi 0, %s236
      %s239 = sphi 0, %s238
      %s253 = sphi 0, %s239
      %s257 = sphi 0, %s257
      %s259 = sphi 0, %s257
      %s260 = sphi 0, %s259
      %s274 = sphi 0, %s260
      %s278 = sphi 0, %s278
      %s280 = sphi 0, %s278
      %s281 = sphi 0, %s280
      %s295 = sphi 0, %s281
      %s299 = sphi 0, %s299
      %s301 = sphi 0, %s299
      %s302 = sphi 0, %s301
      %s316 = sphi 0, %s302
      %s320 = sphi 0, %s320
      %s322 = sphi 0, %s320
      %s323 = sphi 0, %s322
      %s337 = sphi 0, %s323
      %s341 = sphi 0, %s341
      %s343 = sphi 0, %s341
      %s344 = sphi 0, %s343
      %s358 = sphi 0, %s344
      %s362 = sphi 0, %s362
      %s364 = sphi 0, %s362
      %s365 = sphi 0, %s364
      %s379 = sphi 0, %s365
      %s387 = sphi 0, %s389
      %s390 = sphi 0, %s387
      %s391 = sphi 0, %s390
      %s407 = sphi 0, %s391
    $region4: #{tpu_custom_call.1} parent=1 // loop_header_branch
      %37 = sbr.rel (%p35) target = $region8
    $region5: #{tpu_custom_call.1} parent=1 // loop_body
      %s39 = ssub.s32 %s34, 1
      %s40 = ssub.s32 %s34, 2
      %s50 = sadd.s32 1, %s43
      %p51 = scmp.ge.s32.totalorder %s50, 1
      %s52 = scalar_select %p51, 0, %s50
      %s53 = sadd.s32 1, %s42
      %s54 = scalar_select %p51, %s53, %s42
      %p55 = scmp.ge.s32.totalorder %s54, 1
      %s56 = scalar_select %p55, 0, %s54
      %s57 = sadd.s32 1, %s41
      %s58 = scalar_select %p55, %s57, %s41
      %p59 = scmp.ge.s32.totalorder %s58, 2
      %s60 = scalar_select %p59, 0, %s58
      %s61 = ssub.s32 %s41, %s60
      %s62 = ssub.s32 %s42, %s56
      %s63 = sor.u32 %s61, %s62
      %p64 = scmp.eq.s32.totalorder %s63, 0
      %s66 = sadd.s32 %s65, 1
      %s67 = scalar_select %p64, %s65, %s66
      %p70 = pneg %p64
      %p71 = scmp.eq.s32.totalorder %s34, 1
      %p72 = por %p70, %p71
      %p73 = scmp.ne.s32.totalorder %s65, %s68
      %p74 = scmp.eq.s32.totalorder %s34, 0
      %p75 = por %p73, %p74
      %p76 = scmp.ne.s32.totalorder %s65, %s68
      %p77 = scmp.eq.s32.totalorder %s39, 1
      %p78 = por %p76, %p77
      %p79 = scmp.ne.s32.totalorder %s68, %s69
      %p80 = scmp.eq.s32.totalorder %s39, 0
      %p81 = por %p79, %p80
      %p82 = scmp.ne.s32.totalorder %s68, %s69
      %p83 = scmp.eq.s32.totalorder %s40, 1
      %p84 = por %p82, %p83
      %p86 = scmp.ne.s32.totalorder %s69, %s85
      %p87 = scmp.eq.s32.totalorder %s40, 0
      %p88 = por %p86, %p87
      %s89 = ssub.s32 %s41, %s60
      %s90 = ssub.s32 %s42, %s56
      %s91 = sor.u32 %s89, %s90
      %p92 = scmp.eq.s32.totalorder %s91, 0
      %s94 = sadd.s32 %s93, 1
      %s95 = scalar_select %p92, %s93, %s94
      %p98 = pneg %p92
      %p99 = scmp.eq.s32.totalorder %s34, 1
      %p100 = por %p98, %p99
      %p101 = scmp.ne.s32.totalorder %s93, %s96
      %p102 = scmp.eq.s32.totalorder %s34, 0
      %p103 = por %p101, %p102
      %p104 = scmp.ne.s32.totalorder %s93, %s96
      %p105 = scmp.eq.s32.totalorder %s39, 1
      %p106 = por %p104, %p105
      %p107 = scmp.ne.s32.totalorder %s96, %s97
      %p108 = scmp.eq.s32.totalorder %s39, 0
      %p109 = por %p107, %p108
      %p110 = scmp.ne.s32.totalorder %s96, %s97
      %p111 = scmp.eq.s32.totalorder %s40, 1
      %p112 = por %p110, %p111
      %p114 = scmp.ne.s32.totalorder %s97, %s113
      %p115 = scmp.eq.s32.totalorder %s40, 0
      %p116 = por %p114, %p115
      %s117 = ssub.s32 %s41, %s60
      %s118 = ssub.s32 %s43, %s52
      %s119 = sor.u32 %s117, %s118
      %p120 = scmp.eq.s32.totalorder %s119, 0
      %s122 = sadd.s32 %s121, 1
      %s123 = scalar_select %p120, %s121, %s122
      %p126 = pneg %p120
      %p127 = scmp.eq.s32.totalorder %s34, 1
      %p128 = por %p126, %p127
      %p129 = scmp.ne.s32.totalorder %s121, %s124
      %p130 = scmp.eq.s32.totalorder %s34, 0
      %p131 = por %p129, %p130
      %p132 = scmp.ne.s32.totalorder %s121, %s124
      %p133 = scmp.eq.s32.totalorder %s39, 1
      %p134 = por %p132, %p133
      %p135 = scmp.ne.s32.totalorder %s124, %s125
      %p136 = scmp.eq.s32.totalorder %s39, 0
      %p137 = por %p135, %p136
      %p138 = scmp.ne.s32.totalorder %s124, %s125
      %p139 = scmp.eq.s32.totalorder %s40, 1
      %p140 = por %p138, %p139
      %p142 = scmp.ne.s32.totalorder %s125, %s141
      %p143 = scmp.eq.s32.totalorder %s40, 0
      %p144 = por %p142, %p143
      %s145 = ssub.s32 %s41, %s60
      %s146 = ssub.s32 %s43, %s52
      %s147 = sor.u32 %s145, %s146
      %p148 = scmp.eq.s32.totalorder %s147, 0
      %s150 = sadd.s32 %s149, 1
      %s151 = scalar_select %p148, %s149, %s150
      %p154 = pneg %p148
      %p155 = scmp.eq.s32.totalorder %s34, 1
      %p156 = por %p154, %p155
      %p157 = scmp.ne.s32.totalorder %s149, %s152
      %p158 = scmp.eq.s32.totalorder %s34, 0
      %p159 = por %p157, %p158
      %p160 = scmp.ne.s32.totalorder %s149, %s152
      %p161 = scmp.eq.s32.totalorder %s39, 1
      %p162 = por %p160, %p161
      %p163 = scmp.ne.s32.totalorder %s152, %s153
      %p164 = scmp.eq.s32.totalorder %s39, 0
      %p165 = por %p163, %p164
      %p166 = scmp.ne.s32.totalorder %s152, %s153
      %p167 = scmp.eq.s32.totalorder %s40, 1
      %p168 = por %p166, %p167
      %p170 = scmp.ne.s32.totalorder %s153, %s169
      %p171 = scmp.eq.s32.totalorder %s40, 0
      %p172 = por %p170, %p171
      %s174 = sadd.s32 %s173, 1
      %p177 = scmp.eq.s32.totalorder %s34, 1
      %p178 = scmp.ne.s32.totalorder %s173, %s175
      %p179 = scmp.eq.s32.totalorder %s34, 0
      %p180 = por %p178, %p179
      %p181 = scmp.ne.s32.totalorder %s173, %s175
      %p182 = scmp.eq.s32.totalorder %s39, 1
      %p183 = por %p181, %p182
      %p184 = scmp.ne.s32.totalorder %s175, %s176
      %p185 = scmp.eq.s32.totalorder %s39, 0
      %p186 = por %p184, %p185
      %p187 = scmp.ne.s32.totalorder %s175, %s176
      %p188 = scmp.eq.s32.totalorder %s40, 1
      %p189 = por %p187, %p188
      %p191 = scmp.ne.s32.totalorder %s176, %s190
      %p192 = scmp.eq.s32.totalorder %s40, 0
      %p193 = por %p191, %p192
      %s195 = sadd.s32 %s194, 1
      %p198 = scmp.eq.s32.totalorder %s34, 1
      %p199 = scmp.ne.s32.totalorder %s194, %s196
      %p200 = scmp.eq.s32.totalorder %s34, 0
      %p201 = por %p199, %p200
      %p202 = scmp.ne.s32.totalorder %s194, %s196
      %p203 = scmp.eq.s32.totalorder %s39, 1
      %p204 = por %p202, %p203
      %p205 = scmp.ne.s32.totalorder %s196, %s197
      %p206 = scmp.eq.s32.totalorder %s39, 0
      %p207 = por %p205, %p206
      %p208 = scmp.ne.s32.totalorder %s196, %s197
      %p209 = scmp.eq.s32.totalorder %s40, 1
      %p210 = por %p208, %p209
      %p212 = scmp.ne.s32.totalorder %s197, %s211
      %p213 = scmp.eq.s32.totalorder %s40, 0
      %p214 = por %p212, %p213
      %s216 = sadd.s32 %s215, 1
      %p219 = scmp.eq.s32.totalorder %s34, 1
      %p220 = scmp.ne.s32.totalorder %s215, %s217
      %p221 = scmp.eq.s32.totalorder %s34, 0
      %p222 = por %p220, %p221
      %p223 = scmp.ne.s32.totalorder %s215, %s217
      %p224 = scmp.eq.s32.totalorder %s39, 1
      %p225 = por %p223, %p224
      %p226 = scmp.ne.s32.totalorder %s217, %s218
      %p227 = scmp.eq.s32.totalorder %s39, 0
      %p228 = por %p226, %p227
      %p229 = scmp.ne.s32.totalorder %s217, %s218
      %p230 = scmp.eq.s32.totalorder %s40, 1
      %p231 = por %p229, %p230
      %p233 = scmp.ne.s32.totalorder %s218, %s232
      %p234 = scmp.eq.s32.totalorder %s40, 0
      %p235 = por %p233, %p234
      %s237 = sadd.s32 %s236, 1
      %p240 = scmp.eq.s32.totalorder %s34, 1
      %p241 = scmp.ne.s32.totalorder %s236, %s238
      %p242 = scmp.eq.s32.totalorder %s34, 0
      %p243 = por %p241, %p242
      %p244 = scmp.ne.s32.totalorder %s236, %s238
      %p245 = scmp.eq.s32.totalorder %s39, 1
      %p246 = por %p244, %p245
      %p247 = scmp.ne.s32.totalorder %s238, %s239
      %p248 = scmp.eq.s32.totalorder %s39, 0
      %p249 = por %p247, %p248
      %p250 = scmp.ne.s32.totalorder %s238, %s239
      %p251 = scmp.eq.s32.totalorder %s40, 1
      %p252 = por %p250, %p251
      %p254 = scmp.ne.s32.totalorder %s239, %s253
      %p255 = scmp.eq.s32.totalorder %s40, 0
      %p256 = por %p254, %p255
      %s258 = sadd.s32 %s257, 1
      %p261 = scmp.eq.s32.totalorder %s34, 1
      %p262 = scmp.ne.s32.totalorder %s257, %s259
      %p263 = scmp.eq.s32.totalorder %s34, 0
      %p264 = por %p262, %p263
      %p265 = scmp.ne.s32.totalorder %s257, %s259
      %p266 = scmp.eq.s32.totalorder %s39, 1
      %p267 = por %p265, %p266
      %p268 = scmp.ne.s32.totalorder %s259, %s260
      %p269 = scmp.eq.s32.totalorder %s39, 0
      %p270 = por %p268, %p269
      %p271 = scmp.ne.s32.totalorder %s259, %s260
      %p272 = scmp.eq.s32.totalorder %s40, 1
      %p273 = por %p271, %p272
      %p275 = scmp.ne.s32.totalorder %s260, %s274
      %p276 = scmp.eq.s32.totalorder %s40, 0
      %p277 = por %p275, %p276
      %s279 = sadd.s32 %s278, 1
      %p282 = scmp.eq.s32.totalorder %s34, 1
      %p283 = scmp.ne.s32.totalorder %s278, %s280
      %p284 = scmp.eq.s32.totalorder %s34, 0
      %p285 = por %p283, %p284
      %p286 = scmp.ne.s32.totalorder %s278, %s280
      %p287 = scmp.eq.s32.totalorder %s39, 1
      %p288 = por %p286, %p287
      %p289 = scmp.ne.s32.totalorder %s280, %s281
      %p290 = scmp.eq.s32.totalorder %s39, 0
      %p291 = por %p289, %p290
      %p292 = scmp.ne.s32.totalorder %s280, %s281
      %p293 = scmp.eq.s32.totalorder %s40, 1
      %p294 = por %p292, %p293
      %p296 = scmp.ne.s32.totalorder %s281, %s295
      %p297 = scmp.eq.s32.totalorder %s40, 0
      %p298 = por %p296, %p297
      %s300 = sadd.s32 %s299, 1
      %p303 = scmp.eq.s32.totalorder %s34, 1
      %p304 = scmp.ne.s32.totalorder %s299, %s301
      %p305 = scmp.eq.s32.totalorder %s34, 0
      %p306 = por %p304, %p305
      %p307 = scmp.ne.s32.totalorder %s299, %s301
      %p308 = scmp.eq.s32.totalorder %s39, 1
      %p309 = por %p307, %p308
      %p310 = scmp.ne.s32.totalorder %s301, %s302
      %p311 = scmp.eq.s32.totalorder %s39, 0
      %p312 = por %p310, %p311
      %p313 = scmp.ne.s32.totalorder %s301, %s302
      %p314 = scmp.eq.s32.totalorder %s40, 1
      %p315 = por %p313, %p314
      %p317 = scmp.ne.s32.totalorder %s302, %s316
      %p318 = scmp.eq.s32.totalorder %s40, 0
      %p319 = por %p317, %p318
      %s321 = sadd.s32 %s320, 1
      %p324 = scmp.eq.s32.totalorder %s34, 1
      %p325 = scmp.ne.s32.totalorder %s320, %s322
      %p326 = scmp.eq.s32.totalorder %s34, 0
      %p327 = por %p325, %p326
      %p328 = scmp.ne.s32.totalorder %s320, %s322
      %p329 = scmp.eq.s32.totalorder %s39, 1
      %p330 = por %p328, %p329
      %p331 = scmp.ne.s32.totalorder %s322, %s323
      %p332 = scmp.eq.s32.totalorder %s39, 0
      %p333 = por %p331, %p332
      %p334 = scmp.ne.s32.totalorder %s322, %s323
      %p335 = scmp.eq.s32.totalorder %s40, 1
      %p336 = por %p334, %p335
      %p338 = scmp.ne.s32.totalorder %s323, %s337
      %p339 = scmp.eq.s32.totalorder %s40, 0
      %p340 = por %p338, %p339
      %s342 = sadd.s32 %s341, 1
      %p345 = scmp.eq.s32.totalorder %s34, 1
      %p346 = scmp.ne.s32.totalorder %s341, %s343
      %p347 = scmp.eq.s32.totalorder %s34, 0
      %p348 = por %p346, %p347
      %p349 = scmp.ne.s32.totalorder %s341, %s343
      %p350 = scmp.eq.s32.totalorder %s39, 1
      %p351 = por %p349, %p350
      %p352 = scmp.ne.s32.totalorder %s343, %s344
      %p353 = scmp.eq.s32.totalorder %s39, 0
      %p354 = por %p352, %p353
      %p355 = scmp.ne.s32.totalorder %s343, %s344
      %p356 = scmp.eq.s32.totalorder %s40, 1
      %p357 = por %p355, %p356
      %p359 = scmp.ne.s32.totalorder %s344, %s358
      %p360 = scmp.eq.s32.totalorder %s40, 0
      %p361 = por %p359, %p360
      %s363 = sadd.s32 %s362, 1
      %p366 = scmp.eq.s32.totalorder %s34, 1
      %p367 = scmp.ne.s32.totalorder %s362, %s364
      %p368 = scmp.eq.s32.totalorder %s34, 0
      %p369 = por %p367, %p368
      %p370 = scmp.ne.s32.totalorder %s362, %s364
      %p371 = scmp.eq.s32.totalorder %s39, 1
      %p372 = por %p370, %p371
      %p373 = scmp.ne.s32.totalorder %s364, %s365
      %p374 = scmp.eq.s32.totalorder %s39, 0
      %p375 = por %p373, %p374
      %p376 = scmp.ne.s32.totalorder %s364, %s365
      %p377 = scmp.eq.s32.totalorder %s40, 1
      %p378 = por %p376, %p377
      %p380 = scmp.ne.s32.totalorder %s365, %s379
      %p381 = scmp.eq.s32.totalorder %s40, 0
      %p382 = por %p380, %p381
      %s383 = ssub.s32 %s41, %s60
      %s384 = ssub.s32 %s42, %s56
      %s385 = sor.u32 %s383, %s384
      %p386 = scmp.eq.s32.totalorder %s385, 0
      %s388 = sadd.s32 %s387, 1
      %s389 = scalar_select %p386, %s387, %s388
      %p392 = pneg %p386
      %p393 = scmp.eq.s32.totalorder %s34, 1
      %p394 = por %p392, %p393
      %p395 = scmp.ne.s32.totalorder %s387, %s390
      %p396 = scmp.eq.s32.totalorder %s34, 0
      %p397 = por %p395, %p396
      %p398 = scmp.ne.s32.totalorder %s387, %s390
      %p399 = scmp.eq.s32.totalorder %s39, 1
      %p400 = por %p398, %p399
      %p401 = scmp.ne.s32.totalorder %s390, %s391
      %p402 = scmp.eq.s32.totalorder %s39, 0
      %p403 = por %p401, %p402
      %p404 = scmp.ne.s32.totalorder %s390, %s391
      %p405 = scmp.eq.s32.totalorder %s40, 1
      %p406 = por %p404, %p405
      %p408 = scmp.ne.s32.totalorder %s391, %s407
      %p409 = scmp.eq.s32.totalorder %s40, 0
      %p410 = por %p408, %p409
      %p411 = scmp.le.s32.totalorder 1, %s34
      %p412 = scmp.lt.s32.totalorder %s34, 3
      %p413 = pnand %p411, %p412
      %p414 = pneg %p413
      // Predicated region
      $region9: #{tpu_custom_call.1} parent=5 // pred_check
        _
      $region10: #{tpu_custom_call.1} parent=5 // pred_check_branch
        %416 = sbr.rel (%p413) target = $region12
      $region11: #{tpu_custom_call.1} parent=5 // pred_region
        %s417 = ssub.s32 %s34, 1
        // Predicated region
        $region13: #{tpu_custom_call.1} parent=11 // pred_check
          %p418 = pneg %p186
        $region14: #{tpu_custom_call.1} parent=11 // pred_check_branch
          %420 = sbr.rel (%p418) target = $region16
        $region15: #{tpu_custom_call.1} parent=11 // pred_region
          %422 = vsyncadd [#allocation13], 0
          %s423 = sshll.u32 %s4, 4
          %s424 = int_to_ptr.hbm [resolvable:$true] %s423
          %s425 = sshll.u32 [#allocation14], 4
          %s426 = int_to_ptr.vmem [resolvable:$true] %s425
          %431 = dma.hbm_to_vmem [thread:$0]  %s424, 512, %s426, [#allocation13], 128, 128, 8
        $region16: #{tpu_custom_call.1} parent=11 // pred_fallthru
          _
        // Predicated region
        $region17: #{tpu_custom_call.1} parent=11 // pred_check
          %p432 = pneg %p207
        $region18: #{tpu_custom_call.1} parent=11 // pred_check_branch
          %434 = sbr.rel (%p432) target = $region20
        $region19: #{tpu_custom_call.1} parent=11 // pred_region
          _
        $region20: #{tpu_custom_call.1} parent=11 // pred_fallthru
          _
        // Predicated region
        $region21: #{tpu_custom_call.1} parent=11 // pred_check
          %p435 = pneg %p228
        $region22: #{tpu_custom_call.1} parent=11 // pred_check_branch
          %437 = sbr.rel (%p435) target = $region24
        $region23: #{tpu_custom_call.1} parent=11 // pred_region
          %439 = vsyncadd [#allocation16], 0
          %s440 = sshll.u32 %s6, 4
          %s441 = int_to_ptr.hbm [resolvable:$true] %s440
          %s442 = sshll.u32 [#allocation15], 4
          %s443 = int_to_ptr.vmem [resolvable:$true] %s442
          %448 = dma.hbm_to_vmem [thread:$0]  %s441, 512, %s443, [#allocation16], 128, 128, 8
        $region24: #{tpu_custom_call.1} parent=11 // pred_fallthru
          _
        // Predicated region
        $region25: #{tpu_custom_call.1} parent=11 // pred_check
          %p449 = pneg %p249
        $region26: #{tpu_custom_call.1} parent=11 // pred_check_branch
          %451 = sbr.rel (%p449) target = $region28
        $region27: #{tpu_custom_call.1} parent=11 // pred_region
          _
        $region28: #{tpu_custom_call.1} parent=11 // pred_fallthru
          _
        // Predicated region
        $region29: #{tpu_custom_call.1} parent=11 // pred_check
          %p452 = pneg %p270
        $region30: #{tpu_custom_call.1} parent=11 // pred_check_branch
          %454 = sbr.rel (%p452) target = $region32
        $region31: #{tpu_custom_call.1} parent=11 // pred_region
          %456 = vsyncadd [#allocation16], 0
          %s457 = sshll.u32 %s8, 4
          %s458 = int_to_ptr.hbm [resolvable:$true] %s457
          %s459 = sshll.u32 [#allocation17], 4
          %s460 = int_to_ptr.vmem [resolvable:$true] %s459
          %465 = dma.hbm_to_vmem [thread:$0]  %s458, 512, %s460, [#allocation16], 128, 128, 8
        $region32: #{tpu_custom_call.1} parent=11 // pred_fallthru
          _
        // Predicated region
        $region33: #{tpu_custom_call.1} parent=11 // pred_check
          %p466 = pneg %p291
        $region34: #{tpu_custom_call.1} parent=11 // pred_check_branch
          %468 = sbr.rel (%p466) target = $region36
        $region35: #{tpu_custom_call.1} parent=11 // pred_region
          _
        $region36: #{tpu_custom_call.1} parent=11 // pred_fallthru
          _
        // Predicated region
        $region37: #{tpu_custom_call.1} parent=11 // pred_check
          %p469 = pneg %p312
        $region38: #{tpu_custom_call.1} parent=11 // pred_check_branch
          %471 = sbr.rel (%p469) target = $region40
        $region39: #{tpu_custom_call.1} parent=11 // pred_region
          %473 = vsyncadd [#allocation19], 0
          %s474 = sshll.u32 %s10, 4
          %s475 = int_to_ptr.hbm [resolvable:$true] %s474
          %s476 = sshll.u32 [#allocation18], 4
          %s477 = int_to_ptr.vmem [resolvable:$true] %s476
          %482 = dma.hbm_to_vmem [thread:$0]  %s475, 512, %s477, [#allocation19], 128, 128, 8
        $region40: #{tpu_custom_call.1} parent=11 // pred_fallthru
          _
        // Predicated region
        $region41: #{tpu_custom_call.1} parent=11 // pred_check
          %p483 = pneg %p333
        $region42: #{tpu_custom_call.1} parent=11 // pred_check_branch
          %485 = sbr.rel (%p483) target = $region44
        $region43: #{tpu_custom_call.1} parent=11 // pred_region
          _
        $region44: #{tpu_custom_call.1} parent=11 // pred_fallthru
          _
        // Predicated region
        $region45: #{tpu_custom_call.1} parent=11 // pred_check
          %p486 = pneg %p354
        $region46: #{tpu_custom_call.1} parent=11 // pred_check_branch
          %488 = sbr.rel (%p486) target = $region48
        $region47: #{tpu_custom_call.1} parent=11 // pred_region
          _
        $region48: #{tpu_custom_call.1} parent=11 // pred_fallthru
          _
        // Predicated region
        $region49: #{tpu_custom_call.1} parent=11 // pred_check
          %p489 = pneg %p375
        $region50: #{tpu_custom_call.1} parent=11 // pred_check_branch
          %491 = sbr.rel (%p489) target = $region52
        $region51: #{tpu_custom_call.1} parent=11 // pred_region
          _
        $region52: #{tpu_custom_call.1} parent=11 // pred_fallthru
          _
      $region12: #{tpu_custom_call.1} parent=5 // pred_fallthru
        _
      %p492 = scmp.lt.s32.totalorder %s34, 2
      // Predicated region
      $region53: #{tpu_custom_call.1} parent=5 // pred_check
        %p493 = pneg %p492
      $region54: #{tpu_custom_call.1} parent=5 // pred_check_branch
        %495 = sbr.rel (%p493) target = $region56
      $region55: #{tpu_custom_call.1} parent=5 // pred_region
        // Predicated region
        $region57: #{tpu_custom_call.1} parent=55 // pred_check
          %p496 = pneg %p75
        $region58: #{tpu_custom_call.1} parent=55 // pred_check_branch
          %498 = sbr.rel (%p496) target = $region60
        $region59: #{tpu_custom_call.1} parent=55 // pred_region
          %s499 = sand.u32 %s65, 1
          %s500 = scalar_lea.sflag [#allocation7], %s499
          %s501 = sand.u32 %s65, 1
          %s502 = smul.addr %s501, 8
          %s503 = scalar_lea.vmem [#allocation6], %s502
          %505 = vsyncadd %s500, 0
          %s506 = sadd.s32 %s42, %s41
          %s507 = smul.addr %s506, 8
          %s508 = scalar_lea.hbm %s0, %s507
          %s510 = sshll.u32 %s508, 4
          %s511 = int_to_ptr.hbm [resolvable:$true] %s510
          %s512 = sshll.u32 %s503, 4
          %s513 = int_to_ptr.vmem [resolvable:$true] %s512
          %515 = dma.hbm_to_vmem [thread:$0]  %s511, 128, %s513, %s500
        $region60: #{tpu_custom_call.1} parent=55 // pred_fallthru
          _
        // Predicated region
        $region61: #{tpu_custom_call.1} parent=55 // pred_check
          %p516 = pneg %p103
        $region62: #{tpu_custom_call.1} parent=55 // pred_check_branch
          %518 = sbr.rel (%p516) target = $region64
        $region63: #{tpu_custom_call.1} parent=55 // pred_region
          %s519 = sand.u32 %s34, 1
          %s520 = scalar_lea.sflag [#allocation10], %s519
          %s521 = sand.u32 %s93, 1
          %s522 = smul.addr %s521, 8
          %s523 = scalar_lea.vmem [#allocation9], %s522
          %525 = vsyncadd %s520, 0
          %s526 = sadd.s32 %s42, %s41
          %s527 = smul.addr %s526, 8
          %s528 = scalar_lea.hbm %s1, %s527
          %s530 = sshll.u32 %s528, 4
          %s531 = int_to_ptr.hbm [resolvable:$true] %s530
          %s532 = sshll.u32 %s523, 4
          %s533 = int_to_ptr.vmem [resolvable:$true] %s532
          %535 = dma.hbm_to_vmem [thread:$0]  %s531, 128, %s533, %s520
        $region64: #{tpu_custom_call.1} parent=55 // pred_fallthru
          _
        // Predicated region
        $region65: #{tpu_custom_call.1} parent=55 // pred_check
          %p536 = pneg %p131
        $region66: #{tpu_custom_call.1} parent=55 // pred_check_branch
          %538 = sbr.rel (%p536) target = $region68
        $region67: #{tpu_custom_call.1} parent=55 // pred_region
          %s539 = sand.u32 %s34, 1
          %s540 = scalar_lea.sflag [#allocation10], %s539
          %s541 = sand.u32 %s121, 1
          %s542 = smul.addr %s541, 8
          %s543 = scalar_lea.vmem [#allocation11], %s542
          %545 = vsyncadd %s540, 0
          %s546 = sadd.s32 %s43, %s41
          %s547 = smul.addr %s546, 8
          %s548 = scalar_lea.hbm %s2, %s547
          %s550 = sshll.u32 %s548, 4
          %s551 = int_to_ptr.hbm [resolvable:$true] %s550
          %s552 = sshll.u32 %s543, 4
          %s553 = int_to_ptr.vmem [resolvable:$true] %s552
          %555 = dma.hbm_to_vmem [thread:$0]  %s551, 128, %s553, %s540
        $region68: #{tpu_custom_call.1} parent=55 // pred_fallthru
          _
        // Predicated region
        $region69: #{tpu_custom_call.1} parent=55 // pred_check
          %p556 = pneg %p159
        $region70: #{tpu_custom_call.1} parent=55 // pred_check_branch
          %558 = sbr.rel (%p556) target = $region72
        $region71: #{tpu_custom_call.1} parent=55 // pred_region
          %s559 = sand.u32 %s34, 1
          %s560 = scalar_lea.sflag [#allocation13], %s559
          %s561 = sand.u32 %s149, 1
          %s562 = smul.addr %s561, 8
          %s563 = scalar_lea.vmem [#allocation12], %s562
          %565 = vsyncadd %s560, 0
          %s566 = sadd.s32 %s43, %s41
          %s567 = smul.addr %s566, 8
          %s568 = scalar_lea.hbm %s3, %s567
          %s570 = sshll.u32 %s568, 4
          %s571 = int_to_ptr.hbm [resolvable:$true] %s570
          %s572 = sshll.u32 %s563, 4
          %s573 = int_to_ptr.vmem [resolvable:$true] %s572
          %575 = dma.hbm_to_vmem [thread:$0]  %s571, 128, %s573, %s560
        $region72: #{tpu_custom_call.1} parent=55 // pred_fallthru
          _
      $region56: #{tpu_custom_call.1} parent=5 // pred_fallthru
        _
      %p576 = scmp.le.s32.totalorder 1, %s34
      %p577 = scmp.lt.s32.totalorder %s34, 3
      %p578 = pnand %p576, %p577
      %p579 = pneg %p578
      // Predicated region
      $region73: #{tpu_custom_call.1} parent=5 // pred_check
        _
      $region74: #{tpu_custom_call.1} parent=5 // pred_check_branch
        %581 = sbr.rel (%p578) target = $region76
      $region75: #{tpu_custom_call.1} parent=5 // pred_region
        %s582 = ssub.s32 %s34, 1
        %s583 = sand.u32 %s68, 1
        %s584 = scalar_lea.sflag [#allocation7], %s583
        %s585 = sand.u32 %s68, 1
        %s586 = smul.addr %s585, 8
        %s587 = scalar_lea.vmem [#allocation6], %s586
        // Predicated region
        $region77: #{tpu_custom_call.1} parent=75 // pred_check
          %p588 = pneg %p81
        $region78: #{tpu_custom_call.1} parent=75 // pred_check_branch
          %590 = sbr.rel (%p588) target = $region80
        $region79: #{tpu_custom_call.1} parent=75 // pred_region
          %592 = dma.done %s584, 128
        $region80: #{tpu_custom_call.1} parent=75 // pred_fallthru
          _
        %s593 = sand.u32 %s39, 1
        %s594 = scalar_lea.sflag [#allocation10], %s593
        %s595 = sand.u32 %s96, 1
        %s596 = smul.addr %s595, 8
        %s597 = scalar_lea.vmem [#allocation9], %s596
        // Predicated region
        $region81: #{tpu_custom_call.1} parent=75 // pred_check
          %p598 = pneg %p109
        $region82: #{tpu_custom_call.1} parent=75 // pred_check_branch
          %600 = sbr.rel (%p598) target = $region84
        $region83: #{tpu_custom_call.1} parent=75 // pred_region
          %602 = dma.done %s594, 128
        $region84: #{tpu_custom_call.1} parent=75 // pred_fallthru
          _
        %s603 = sand.u32 %s39, 1
        %s604 = scalar_lea.sflag [#allocation10], %s603
        %s605 = sand.u32 %s124, 1
        %s606 = smul.addr %s605, 8
        %s607 = scalar_lea.vmem [#allocation11], %s606
        // Predicated region
        $region85: #{tpu_custom_call.1} parent=75 // pred_check
          %p608 = pneg %p137
        $region86: #{tpu_custom_call.1} parent=75 // pred_check_branch
          %610 = sbr.rel (%p608) target = $region88
        $region87: #{tpu_custom_call.1} parent=75 // pred_region
          %612 = dma.done %s604, 128
        $region88: #{tpu_custom_call.1} parent=75 // pred_fallthru
          _
        %s613 = sand.u32 %s39, 1
        %s614 = scalar_lea.sflag [#allocation13], %s613
        %s615 = sand.u32 %s152, 1
        %s616 = smul.addr %s615, 8
        %s617 = scalar_lea.vmem [#allocation12], %s616
        // Predicated region
        $region89: #{tpu_custom_call.1} parent=75 // pred_check
          %p618 = pneg %p165
        $region90: #{tpu_custom_call.1} parent=75 // pred_check_branch
          %620 = sbr.rel (%p618) target = $region92
        $region91: #{tpu_custom_call.1} parent=75 // pred_region
          %622 = dma.done %s614, 128
        $region92: #{tpu_custom_call.1} parent=75 // pred_fallthru
          _
        // Predicated region
        $region93: #{tpu_custom_call.1} parent=75 // pred_check
          %p623 = pneg %p186
        $region94: #{tpu_custom_call.1} parent=75 // pred_check_branch
          %625 = sbr.rel (%p623) target = $region96
        $region95: #{tpu_custom_call.1} parent=75 // pred_region
          %627 = dma.done [#allocation13], 512
        $region96: #{tpu_custom_call.1} parent=75 // pred_fallthru
          _
        // Predicated region
        $region97: #{tpu_custom_call.1} parent=75 // pred_check
          %p628 = pneg %p228
        $region98: #{tpu_custom_call.1} parent=75 // pred_check_branch
          %630 = sbr.rel (%p628) target = $region100
        $region99: #{tpu_custom_call.1} parent=75 // pred_region
          %632 = dma.done [#allocation16], 512
        $region100: #{tpu_custom_call.1} parent=75 // pred_fallthru
          _
        // Predicated region
        $region101: #{tpu_custom_call.1} parent=75 // pred_check
          %p633 = pneg %p270
        $region102: #{tpu_custom_call.1} parent=75 // pred_check_branch
          %635 = sbr.rel (%p633) target = $region104
        $region103: #{tpu_custom_call.1} parent=75 // pred_region
          %637 = dma.done [#allocation16], 512
        $region104: #{tpu_custom_call.1} parent=75 // pred_fallthru
          _
        // Predicated region
        $region105: #{tpu_custom_call.1} parent=75 // pred_check
          %p638 = pneg %p312
        $region106: #{tpu_custom_call.1} parent=75 // pred_check_branch
          %640 = sbr.rel (%p638) target = $region108
        $region107: #{tpu_custom_call.1} parent=75 // pred_region
          %642 = dma.done [#allocation19], 512
        $region108: #{tpu_custom_call.1} parent=75 // pred_fallthru
          _
        %s643 = sand.u32 %s68, 1
        %s644 = scalar_lea.sflag [#allocation7], %s643
        %s645 = sand.u32 %s68, 1
        %s646 = smul.addr %s645, 8
        %s647 = scalar_lea.vmem [#allocation6], %s646
        %p648 = pneg %p81
        %p649 = pneg %p78
        %s650 = sand.u32 %s39, 1
        %s651 = scalar_lea.sflag [#allocation10], %s650
        %s652 = sand.u32 %s96, 1
        %s653 = smul.addr %s652, 8
        %s654 = scalar_lea.vmem [#allocation9], %s653
        %p655 = pneg %p109
        %p656 = pneg %p106
        %s657 = sand.u32 %s39, 1
        %s658 = scalar_lea.sflag [#allocation10], %s657
        %s659 = sand.u32 %s124, 1
        %s660 = smul.addr %s659, 8
        %s661 = scalar_lea.vmem [#allocation11], %s660
        %p662 = pneg %p137
        %p663 = pneg %p134
        %s664 = sand.u32 %s39, 1
        %s665 = scalar_lea.sflag [#allocation13], %s664
        %s666 = sand.u32 %s152, 1
        %s667 = smul.addr %s666, 8
        %s668 = scalar_lea.vmem [#allocation12], %s667
        %p669 = pneg %p165
        %p670 = pneg %p162
        %p671 = pneg %p186
        %p672 = pneg %p183
        %p673 = pneg %p207
        %p674 = pneg %p204
        %p675 = pneg %p228
        %p676 = pneg %p225
        %p677 = pneg %p249
        %p678 = pneg %p246
        %p679 = pneg %p270
        %p680 = pneg %p267
        %p681 = pneg %p291
        %p682 = pneg %p288
        %p683 = pneg %p312
        %p684 = pneg %p309
        %p685 = pneg %p333
        %p686 = pneg %p330
        %p687 = pneg %p354
        %p688 = pneg %p351
        %p689 = pneg %p375
        %p690 = pneg %p372
        %p691 = pneg %p403
        %p692 = pneg %p400
        %s693 = sand.u32 %s390, 1
        %s694 = scalar_lea.sflag [#allocation8], %s693
        %s695 = sand.u32 %s390, 1
        %s696 = smul.addr %s695, 8
        %s697 = scalar_lea.vmem [#allocation20], %s696
        %p699 = scmp.eq.s32.totalorder %s46, 0
        // Predicated region
        $region109: #{tpu_custom_call.1} parent=75 // pred_check
          %p700 = pneg %p699
        $region110: #{tpu_custom_call.1} parent=75 // pred_check_branch
          %702 = sbr.rel (%p700) target = $region112
        $region111: #{tpu_custom_call.1} parent=75 // pred_region
          %v703 = vld [vmem:[%s587] sm:$0xff]
          %v704 = vld [vmem:[%s597] sm:$0xff]
          %v705 = vadd.f32 %v703, %v704
          %v706 = vpack.c.bf16 %v705, %v705
          %v707 = vld [vmem:[#allocation14] sm:$0xff]
          %v708 = vld [vmem:[#allocation14 + $0x8] sm:$0xff]
          %v709 = vld [vmem:[#allocation14 + $0x10] sm:$0xff]
          %v710 = vld [vmem:[#allocation14 + $0x18] sm:$0xff]
          %v711 = vpack.c.bf16 %v708, %v707
          %v712 = vpack.c.bf16 %v710, %v709
          %v713 = vld [vmem:[%s5] sm:$0x1]
          %v715 = vperm.slane %v713, 0
          %vm717 = vcmask 261120
          %v719 = vsel %vm717, %v706, 0
          %721 = vmatpush.bf16.msra.mxu0 0
          %722 = vmatpush.bf16.msra.mxu0 0
          %723 = vmatpush.bf16.msra.mxu0 0
          %724 = vmatpush.bf16.msra.mxu0 0
          %725 = vmatpush.bf16.msra.mxu0 0
          %726 = vmatpush.bf16.msra.mxu0 0
          %727 = vmatpush.bf16.msra.mxu0 %v712
          %728 = vmatpush.bf16.msra.mxu0 %v711
          %729 = vmatmul.bf16.gmra.mxu0 %v719
          %v730 = vpop.f32.mrf.mxu0
          %v731 = vadd.f32 %v715, %v730
          %v732 = vpop.f32.mrf.mxu0
          %733 = vdwg.mxu0
          %v734 = vmul.f32 %v731, 0.35355338
          %v735 = vpack.c.bf16 %v734, %v734
          %vm736 = vcmask 60416
          %737 = vst.msk [vmem:[#allocation2] sm:$0xf] %vm736, %v735
          %739 = vrot.lane.b32.xlu0 %v735, 120
          %v740 = vpop.permute.xlu0 %739
          %s742 = scalar_lea.vmem [#allocation2], 4
          %743 = vst.msk [vmem:[%s742] sm:$0xf] %vm736, %v740
          %744 = vrot.lane.b32.xlu0 %v735, 112
          %v745 = vpop.permute.xlu0 %744
          %s747 = scalar_lea.vmem [#allocation2], 8
          %748 = vst.msk [vmem:[%s747] sm:$0xf] %vm736, %v745
          %749 = vrot.lane.b32.xlu0 %v735, 104
          %v750 = vpop.permute.xlu0 %749
          %s752 = scalar_lea.vmem [#allocation2], 12
          %753 = vst.msk [vmem:[%s752] sm:$0xf] %vm736, %v750
          %vm754 = vcmask 7168
          %755 = vst.msk [vmem:[#allocation3] sm:$0xff] %vm754, -inf
          %756 = vst.msk [vmem:[#allocation3 + $0x8] sm:$0xff] %vm754, -inf
          %757 = vst.msk [vmem:[#allocation3 + $0x10] sm:$0xff] %vm754, -inf
          %758 = vst.msk [vmem:[#allocation3 + $0x18] sm:$0xff] %vm754, -inf
          %759 = vst.msk [vmem:[#allocation4] sm:$0xff] %vm754, 0.0
          %760 = vst.msk [vmem:[#allocation4 + $0x8] sm:$0xff] %vm754, 0.0
          %761 = vst.msk [vmem:[#allocation4 + $0x10] sm:$0xff] %vm754, 0.0
          %762 = vst.msk [vmem:[#allocation4 + $0x18] sm:$0xff] %vm754, 0.0
          %vm763 = vcmask 64512
          %764 = vst.msk [vmem:[#allocation5] sm:$0xff] %vm763, 0.0
          %765 = vst.msk [vmem:[#allocation5 + $0x8] sm:$0xff] %vm763, 0.0
          %766 = vst.msk [vmem:[#allocation5 + $0x10] sm:$0xff] %vm763, 0.0
          %767 = vst.msk [vmem:[#allocation5 + $0x18] sm:$0xff] %vm763, 0.0
        $region112: #{tpu_custom_call.1} parent=75 // pred_fallthru
          _
        %v768 = vld [vmem:[%s607] sm:$0xff]
        %v769 = vld [vmem:[%s617] sm:$0xff]
        %v770 = vadd.f32 %v768, %v769
        %v771 = vpack.c.bf16 %v770, %v770
        %v772 = vld [vmem:[#allocation15] sm:$0xff]
        %v773 = vld [vmem:[#allocation15 + $0x8] sm:$0xff]
        %v774 = vld [vmem:[#allocation15 + $0x10] sm:$0xff]
        %v775 = vld [vmem:[#allocation15 + $0x18] sm:$0xff]
        %v776 = vpack.c.bf16 %v773, %v772
        %v777 = vpack.c.bf16 %v775, %v774
        %v778 = vld [vmem:[%s7] sm:$0x1]
        %v780 = vperm.slane %v778, 0
        %vm782 = vcmask 261120
        %v784 = vsel %vm782, %v771, 0
        %786 = vmatpush.bf16.msra.mxu0 0
        %787 = vmatpush.bf16.msra.mxu0 0
        %788 = vmatpush.bf16.msra.mxu0 0
        %789 = vmatpush.bf16.msra.mxu0 0
        %790 = vmatpush.bf16.msra.mxu0 0
        %791 = vmatpush.bf16.msra.mxu0 0
        %792 = vmatpush.bf16.msra.mxu0 %v777
        %793 = vmatpush.bf16.msra.mxu0 %v776
        %794 = vmatmul.bf16.gmra.mxu0 %v784
        %v795 = vpop.f32.mrf.mxu0
        %v796 = vadd.f32 %v780, %v795
        %v797 = vpop.f32.mrf.mxu0
        %798 = vdwg.mxu0
        %v799 = vpack.c.bf16 %v768, %v768
        %v800 = vld [vmem:[#allocation17] sm:$0xff]
        %v801 = vld [vmem:[#allocation17 + $0x8] sm:$0xff]
        %v802 = vld [vmem:[#allocation17 + $0x10] sm:$0xff]
        %v803 = vld [vmem:[#allocation17 + $0x18] sm:$0xff]
        %v804 = vpack.c.bf16 %v801, %v800
        %v805 = vpack.c.bf16 %v803, %v802
        %v806 = vld [vmem:[%s9] sm:$0x1]
        %v808 = vperm.slane %v806, 0
        %v811 = vsel %vm782, %v799, 0
        %813 = vmatpush.bf16.msra.mxu0 0
        %814 = vmatpush.bf16.msra.mxu0 0
        %815 = vmatpush.bf16.msra.mxu0 0
        %816 = vmatpush.bf16.msra.mxu0 0
        %817 = vmatpush.bf16.msra.mxu0 0
        %818 = vmatpush.bf16.msra.mxu0 0
        %819 = vmatpush.bf16.msra.mxu0 %v805
        %820 = vmatpush.bf16.msra.mxu0 %v804
        %821 = vmatmul.bf16.gmra.mxu0 %v811
        %v822 = vpop.f32.mrf.mxu0
        %v823 = vadd.f32 %v808, %v822
        %v824 = vpop.f32.mrf.mxu0
        %825 = vdwg.mxu0
        %v826 = vpack.c.bf16 %v796, %v796
        %v827 = vpack.c.bf16 %v823, %v823
        %v828 = vld [vmem:[#allocation2] sm:$0xf]
        %vm829 = vcmask 64512
        %v831 = vsel %vm829, %v828, 0
        %v834 = vsel %vm829, %v826, 0
        %836 = vmatpush.bf16.xpose.msra.mxu0 0
        %837 = vmatpush.bf16.xpose.msra.mxu0 0
        %838 = vmatpush.bf16.xpose.msra.mxu0 0
        %839 = vmatpush.bf16.xpose.msra.mxu0 0
        %840 = vmatpush.bf16.xpose.msra.mxu0 0
        %841 = vmatpush.bf16.xpose.msra.mxu0 0
        %842 = vmatpush.bf16.xpose.msra.mxu0 0
        %843 = vmatpush.bf16.xpose.msra.mxu0 %v834
        %844 = vmatmul.bf16.gmra.mxu0 %v831
        %v845 = vpop.f32.mrf.mxu0
        %v846 = vadd.f32 0.0, %v845
        %v847 = vpop.f32.mrf.mxu0
        %848 = vdwg.mxu0
        %v849 = vld [vmem:[#allocation3] sm:$0xff]
        %v850 = vsel %vm829, %v846, -inf
        %851 = vmax.xlane.f32.xlu0 %v850
        %v852 = vpop.xlane.xlu0 %851
        %v853 = vmax.f32 %v849, %v852
        %v854 = vsub.f32 %v849, %v853
        %v855 = vmul.f32 %v854, 1.442695
        %v856 = vpow.pop %v855
        %858 = vset.pattern.permute.xlu0 0
        %859 = vperm.xlu0 %858, %v853
        %v860 = vpop.permute.xlu0 %859
        %v862 = vsub.f32 %v846, %v860
        %v863 = vmul.f32 %v862, 1.442695
        %v864 = vpow.pop %v863
        %v865 = vld [vmem:[#allocation4] sm:$0xff]
        %v866 = vmul.f32 %v856, %v865
        %v867 = vsel %vm829, %v864, 0.0
        %868 = vadd.xlane.f32.xlu0 %v867
        %v869 = vpop.xlane.xlu0 %868
        %v870 = vadd.f32 %v866, %v869
        %vm871 = vcmask 7168
        %872 = vst.msk [vmem:[#allocation4] sm:$0xff] %vm871, %v870
        %v873 = vld [vmem:[#allocation5] sm:$0xff]
        %875 = vset.pattern.permute.xlu0 0
        %876 = vperm.xlu0 %875, %v856
        %v877 = vpop.permute.xlu0 %876
        %v879 = vmul.f32 %v877, %v873
        %v880 = vpack.c.bf16 %v864, %v864
        %v882 = vsel %vm829, %v880, 0
        %vm884 = vcmask 1043456
        %v886 = vsel %vm884, %v827, 0
        %888 = vmatpush.bf16.msra.mxu0 0
        %889 = vmatpush.bf16.msra.mxu0 0
        %890 = vmatpush.bf16.msra.mxu0 0
        %891 = vmatpush.bf16.msra.mxu0 0
        %892 = vmatpush.bf16.msra.mxu0 0
        %893 = vmatpush.bf16.msra.mxu0 0
        %894 = vmatpush.bf16.msra.mxu0 0
        %895 = vmatpush.bf16.msra.mxu0 %v886
        %896 = vmatmul.bf16.gmra.mxu0 %v882
        %v897 = vpop.f32.mrf.mxu0
        %v898 = vadd.f32 0.0, %v897
        %v899 = vpop.f32.mrf.mxu0
        %900 = vdwg.mxu0
        %v901 = vadd.f32 %v879, %v898
        %902 = vst.msk [vmem:[#allocation5] sm:$0xff] %vm829, %v901
        %903 = vst.msk [vmem:[#allocation3] sm:$0xff] %vm871, %v853
        %s904 = scalar_lea.vmem [#allocation2], 4
        %v905 = vld [vmem:[%s904] sm:$0xf]
        %907 = vrot.lane.b32.xlu0 %v826, 120
        %v908 = vpop.permute.xlu0 %907
        %v910 = vsel %vm829, %v905, 0
        %v913 = vsel %vm829, %v908, 0
        %915 = vmatpush.bf16.xpose.msra.mxu0 0
        %916 = vmatpush.bf16.xpose.msra.mxu0 0
        %917 = vmatpush.bf16.xpose.msra.mxu0 0
        %918 = vmatpush.bf16.xpose.msra.mxu0 0
        %919 = vmatpush.bf16.xpose.msra.mxu0 0
        %920 = vmatpush.bf16.xpose.msra.mxu0 0
        %921 = vmatpush.bf16.xpose.msra.mxu0 0
        %922 = vmatpush.bf16.xpose.msra.mxu0 %v913
        %923 = vmatmul.bf16.gmra.mxu0 %v910
        %v924 = vpop.f32.mrf.mxu0
        %v925 = vadd.f32 0.0, %v924
        %v926 = vpop.f32.mrf.mxu0
        %927 = vdwg.mxu0
        %s928 = scalar_lea.vmem [#allocation3], 8
        %v929 = vld [vmem:[%s928] sm:$0xff]
        %v930 = vsel %vm829, %v925, -inf
        %931 = vmax.xlane.f32.xlu0 %v930
        %v932 = vpop.xlane.xlu0 %931
        %v933 = vmax.f32 %v929, %v932
        %v934 = vsub.f32 %v929, %v933
        %v935 = vmul.f32 %v934, 1.442695
        %v936 = vpow.pop %v935
        %938 = vset.pattern.permute.xlu0 0
        %939 = vperm.xlu0 %938, %v933
        %v940 = vpop.permute.xlu0 %939
        %v942 = vsub.f32 %v925, %v940
        %v943 = vmul.f32 %v942, 1.442695
        %v944 = vpow.pop %v943
        %s945 = scalar_lea.vmem [#allocation4], 8
        %v946 = vld [vmem:[%s945] sm:$0xff]
        %v947 = vmul.f32 %v936, %v946
        %v948 = vsel %vm829, %v944, 0.0
        %949 = vadd.xlane.f32.xlu0 %v948
        %v950 = vpop.xlane.xlu0 %949
        %v951 = vadd.f32 %v947, %v950
        %952 = vst.msk [vmem:[%s945] sm:$0xff] %vm871, %v951
        %s953 = scalar_lea.vmem [#allocation5], 8
        %v954 = vld [vmem:[%s953] sm:$0xff]
        %956 = vset.pattern.permute.xlu0 0
        %957 = vperm.xlu0 %956, %v936
        %v958 = vpop.permute.xlu0 %957
        %v960 = vmul.f32 %v958, %v954
        %v961 = vpack.c.bf16 %v944, %v944
        %963 = vrot.lane.b32.xlu0 %v827, 120
        %v964 = vpop.permute.xlu0 %963
        %v966 = vsel %vm829, %v961, 0
        %v969 = vsel %vm884, %v964, 0
        %971 = vmatpush.bf16.msra.mxu0 0
        %972 = vmatpush.bf16.msra.mxu0 0
        %973 = vmatpush.bf16.msra.mxu0 0
        %974 = vmatpush.bf16.msra.mxu0 0
        %975 = vmatpush.bf16.msra.mxu0 0
        %976 = vmatpush.bf16.msra.mxu0 0
        %977 = vmatpush.bf16.msra.mxu0 0
        %978 = vmatpush.bf16.msra.mxu0 %v969
        %979 = vmatmul.bf16.gmra.mxu0 %v966
        %v980 = vpop.f32.mrf.mxu0
        %v981 = vadd.f32 0.0, %v980
        %v982 = vpop.f32.mrf.mxu0
        %983 = vdwg.mxu0
        %v984 = vadd.f32 %v960, %v981
        %985 = vst.msk [vmem:[%s953] sm:$0xff] %vm829, %v984
        %986 = vst.msk [vmem:[%s928] sm:$0xff] %vm871, %v933
        %s987 = scalar_lea.vmem [#allocation2], 8
        %v988 = vld [vmem:[%s987] sm:$0xf]
        %989 = vrot.lane.b32.xlu0 %v826, 112
        %v990 = vpop.permute.xlu0 %989
        %v992 = vsel %vm829, %v988, 0
        %v995 = vsel %vm829, %v990, 0
        %997 = vmatpush.bf16.xpose.msra.mxu0 0
        %998 = vmatpush.bf16.xpose.msra.mxu0 0
        %999 = vmatpush.bf16.xpose.msra.mxu0 0
        %1000 = vmatpush.bf16.xpose.msra.mxu0 0
        %1001 = vmatpush.bf16.xpose.msra.mxu0 0
        %1002 = vmatpush.bf16.xpose.msra.mxu0 0
        %1003 = vmatpush.bf16.xpose.msra.mxu0 0
        %1004 = vmatpush.bf16.xpose.msra.mxu0 %v995
        %1005 = vmatmul.bf16.gmra.mxu0 %v992
        %v1006 = vpop.f32.mrf.mxu0
        %v1007 = vadd.f32 0.0, %v1006
        %v1008 = vpop.f32.mrf.mxu0
        %1009 = vdwg.mxu0
        %s1010 = scalar_lea.vmem [#allocation3], 16
        %v1011 = vld [vmem:[%s1010] sm:$0xff]
        %v1012 = vsel %vm829, %v1007, -inf
        %1013 = vmax.xlane.f32.xlu0 %v1012
        %v1014 = vpop.xlane.xlu0 %1013
        %v1015 = vmax.f32 %v1011, %v1014
        %v1016 = vsub.f32 %v1011, %v1015
        %v1017 = vmul.f32 %v1016, 1.442695
        %v1018 = vpow.pop %v1017
        %1020 = vset.pattern.permute.xlu0 0
        %1021 = vperm.xlu0 %1020, %v1015
        %v1022 = vpop.permute.xlu0 %1021
        %v1024 = vsub.f32 %v1007, %v1022
        %v1025 = vmul.f32 %v1024, 1.442695
        %v1026 = vpow.pop %v1025
        %s1027 = scalar_lea.vmem [#allocation4], 16
        %v1028 = vld [vmem:[%s1027] sm:$0xff]
        %v1029 = vmul.f32 %v1018, %v1028
        %v1030 = vsel %vm829, %v1026, 0.0
        %1031 = vadd.xlane.f32.xlu0 %v1030
        %v1032 = vpop.xlane.xlu0 %1031
        %v1033 = vadd.f32 %v1029, %v1032
        %1034 = vst.msk [vmem:[%s1027] sm:$0xff] %vm871, %v1033
        %s1035 = scalar_lea.vmem [#allocation5], 16
        %v1036 = vld [vmem:[%s1035] sm:$0xff]
        %1038 = vset.pattern.permute.xlu0 0
        %1039 = vperm.xlu0 %1038, %v1018
        %v1040 = vpop.permute.xlu0 %1039
        %v1042 = vmul.f32 %v1040, %v1036
        %v1043 = vpack.c.bf16 %v1026, %v1026
        %1044 = vrot.lane.b32.xlu0 %v827, 112
        %v1045 = vpop.permute.xlu0 %1044
        %v1047 = vsel %vm829, %v1043, 0
        %v1050 = vsel %vm884, %v1045, 0
        %1052 = vmatpush.bf16.msra.mxu0 0
        %1053 = vmatpush.bf16.msra.mxu0 0
        %1054 = vmatpush.bf16.msra.mxu0 0
        %1055 = vmatpush.bf16.msra.mxu0 0
        %1056 = vmatpush.bf16.msra.mxu0 0
        %1057 = vmatpush.bf16.msra.mxu0 0
        %1058 = vmatpush.bf16.msra.mxu0 0
        %1059 = vmatpush.bf16.msra.mxu0 %v1050
        %1060 = vmatmul.bf16.gmra.mxu0 %v1047
        %v1061 = vpop.f32.mrf.mxu0
        %v1062 = vadd.f32 0.0, %v1061
        %v1063 = vpop.f32.mrf.mxu0
        %1064 = vdwg.mxu0
        %v1065 = vadd.f32 %v1042, %v1062
        %1066 = vst.msk [vmem:[%s1035] sm:$0xff] %vm829, %v1065
        %1067 = vst.msk [vmem:[%s1010] sm:$0xff] %vm871, %v1015
        %s1068 = scalar_lea.vmem [#allocation2], 12
        %v1069 = vld [vmem:[%s1068] sm:$0xf]
        %1070 = vrot.lane.b32.xlu0 %v826, 104
        %v1071 = vpop.permute.xlu0 %1070
        %v1073 = vsel %vm829, %v1069, 0
        %v1076 = vsel %vm829, %v1071, 0
        %1078 = vmatpush.bf16.xpose.msra.mxu0 0
        %1079 = vmatpush.bf16.xpose.msra.mxu0 0
        %1080 = vmatpush.bf16.xpose.msra.mxu0 0
        %1081 = vmatpush.bf16.xpose.msra.mxu0 0
        %1082 = vmatpush.bf16.xpose.msra.mxu0 0
        %1083 = vmatpush.bf16.xpose.msra.mxu0 0
        %1084 = vmatpush.bf16.xpose.msra.mxu0 0
        %1085 = vmatpush.bf16.xpose.msra.mxu0 %v1076
        %1086 = vmatmul.bf16.gmra.mxu0 %v1073
        %v1087 = vpop.f32.mrf.mxu0
        %v1088 = vadd.f32 0.0, %v1087
        %v1089 = vpop.f32.mrf.mxu0
        %1090 = vdwg.mxu0
        %s1091 = scalar_lea.vmem [#allocation3], 24
        %v1092 = vld [vmem:[%s1091] sm:$0xff]
        %v1093 = vsel %vm829, %v1088, -inf
        %1094 = vmax.xlane.f32.xlu0 %v1093
        %v1095 = vpop.xlane.xlu0 %1094
        %v1096 = vmax.f32 %v1092, %v1095
        %v1097 = vsub.f32 %v1092, %v1096
        %v1098 = vmul.f32 %v1097, 1.442695
        %v1099 = vpow.pop %v1098
        %1101 = vset.pattern.permute.xlu0 0
        %1102 = vperm.xlu0 %1101, %v1096
        %v1103 = vpop.permute.xlu0 %1102
        %v1105 = vsub.f32 %v1088, %v1103
        %v1106 = vmul.f32 %v1105, 1.442695
        %v1107 = vpow.pop %v1106
        %s1108 = scalar_lea.vmem [#allocation4], 24
        %v1109 = vld [vmem:[%s1108] sm:$0xff]
        %v1110 = vmul.f32 %v1099, %v1109
        %v1111 = vsel %vm829, %v1107, 0.0
        %1112 = vadd.xlane.f32.xlu0 %v1111
        %v1113 = vpop.xlane.xlu0 %1112
        %v1114 = vadd.f32 %v1110, %v1113
        %1115 = vst.msk [vmem:[%s1108] sm:$0xff] %vm871, %v1114
        %s1116 = scalar_lea.vmem [#allocation5], 24
        %v1117 = vld [vmem:[%s1116] sm:$0xff]
        %1119 = vset.pattern.permute.xlu0 0
        %1120 = vperm.xlu0 %1119, %v1099
        %v1121 = vpop.permute.xlu0 %1120
        %v1123 = vmul.f32 %v1121, %v1117
        %v1124 = vpack.c.bf16 %v1107, %v1107
        %1125 = vrot.lane.b32.xlu0 %v827, 104
        %v1126 = vpop.permute.xlu0 %1125
        %v1128 = vsel %vm829, %v1124, 0
        %v1131 = vsel %vm884, %v1126, 0
        %1133 = vmatpush.bf16.msra.mxu0 0
        %1134 = vmatpush.bf16.msra.mxu0 0
        %1135 = vmatpush.bf16.msra.mxu0 0
        %1136 = vmatpush.bf16.msra.mxu0 0
        %1137 = vmatpush.bf16.msra.mxu0 0
        %1138 = vmatpush.bf16.msra.mxu0 0
        %1139 = vmatpush.bf16.msra.mxu0 0
        %1140 = vmatpush.bf16.msra.mxu0 %v1131
        %1141 = vmatmul.bf16.gmra.mxu0 %v1128
        %v1142 = vpop.f32.mrf.mxu0
        %v1143 = vadd.f32 0.0, %v1142
        %v1144 = vpop.f32.mrf.mxu0
        %1145 = vdwg.mxu0
        %v1146 = vadd.f32 %v1123, %v1143
        %1147 = vst.msk [vmem:[%s1116] sm:$0xff] %vm829, %v1146
        %1148 = vst.msk [vmem:[%s1091] sm:$0xff] %vm871, %v1096
        // Predicated region
        $region113: #{tpu_custom_call.1} parent=75 // pred_check
          %p1149 = pneg %p699
        $region114: #{tpu_custom_call.1} parent=75 // pred_check_branch
          %1151 = sbr.rel (%p1149) target = $region116
        $region115: #{tpu_custom_call.1} parent=75 // pred_region
          %v1152 = vld [vmem:[#allocation4] sm:$0xff]
          %v1153 = vrcp.pop %v1152
          %v1154 = vld [vmem:[#allocation5] sm:$0xff]
          %1156 = vset.pattern.permute.xlu0 0
          %1157 = vperm.xlu0 %1156, %v1153
          %v1158 = vpop.permute.xlu0 %1157
          %v1160 = vmul.f32 %v1154, %v1158
          %v1161 = vld [vmem:[%s945] sm:$0xff]
          %v1162 = vrcp.pop %v1161
          %v1163 = vld [vmem:[%s953] sm:$0xff]
          %1165 = vset.pattern.permute.xlu0 0
          %1166 = vperm.xlu0 %1165, %v1162
          %v1167 = vpop.permute.xlu0 %1166
          %v1169 = vmul.f32 %v1163, %v1167
          %v1170 = vld [vmem:[%s1027] sm:$0xff]
          %v1171 = vrcp.pop %v1170
          %v1172 = vld [vmem:[%s1035] sm:$0xff]
          %1174 = vset.pattern.permute.xlu0 0
          %1175 = vperm.xlu0 %1174, %v1171
          %v1176 = vpop.permute.xlu0 %1175
          %v1178 = vmul.f32 %v1172, %v1176
          %v1179 = vld [vmem:[%s1108] sm:$0xff]
          %v1180 = vrcp.pop %v1179
          %v1181 = vld [vmem:[%s1116] sm:$0xff]
          %1183 = vset.pattern.permute.xlu0 0
          %1184 = vperm.xlu0 %1183, %v1180
          %v1185 = vpop.permute.xlu0 %1184
          %v1187 = vmul.f32 %v1181, %v1185
          %1189 = vrot.lane.b32.xlu0 %v1169, 8
          %v1190 = vpop.permute.xlu0 %1189
          %1193 = vrot.lane.b32.xlu0 %v1178, 16
          %v1194 = vpop.permute.xlu0 %1193
          %1197 = vrot.lane.b32.xlu0 %v1187, 24
          %v1198 = vpop.permute.xlu0 %1197
          %v1200 = vsel %vm829, %v1160, %v1190
          %vm1201 = vcmask 130048
          %v1202 = vsel %vm1201, %v1200, %v1194
          %vm1203 = vcmask 195584
          %v1204 = vsel %vm1203, %v1202, %v1198
          %v1205 = vpack.c.bf16 %v1204, %v1204
          %v1206 = vld [vmem:[#allocation18] sm:$0xff]
          %v1207 = vld [vmem:[#allocation18 + $0x8] sm:$0xff]
          %v1208 = vld [vmem:[#allocation18 + $0x10] sm:$0xff]
          %v1209 = vld [vmem:[#allocation18 + $0x18] sm:$0xff]
          %v1210 = vpack.c.bf16 %v1207, %v1206
          %v1211 = vpack.c.bf16 %v1209, %v1208
          %v1212 = vld [vmem:[%s11] sm:$0x1]
          %v1214 = vperm.slane %v1212, 0
          %v1217 = vsel %vm782, %v1205, 0
          %1219 = vmatpush.bf16.msra.mxu0 0
          %1220 = vmatpush.bf16.msra.mxu0 0
          %1221 = vmatpush.bf16.msra.mxu0 0
          %1222 = vmatpush.bf16.msra.mxu0 0
          %1223 = vmatpush.bf16.msra.mxu0 0
          %1224 = vmatpush.bf16.msra.mxu0 0
          %1225 = vmatpush.bf16.msra.mxu0 %v1211
          %1226 = vmatpush.bf16.msra.mxu0 %v1210
          %1227 = vmatmul.bf16.gmra.mxu0 %v1217
          %v1228 = vpop.f32.mrf.mxu0
          %v1229 = vadd.f32 %v1214, %v1228
          %v1230 = vpop.f32.mrf.mxu0
          %1231 = vdwg.mxu0
          %v1232 = vld [vmem:[%s587] sm:$0xff]
          %v1233 = vadd.f32 %v1232, %v1229
          %v1234 = vsel %vm782, %v1233, 0.0
          %1235 = vadd.xlane.f32.xlu0 %v1234
          %v1236 = vpop.xlane.xlu0 %1235
          %v1237 = vrcp.pop 32.0
          %v1238 = vmul.f32 32.0, %v1237
          %v1239 = vsub.f32 1.0, %v1238
          %v1240 = vmul.f32 %v1237, %v1239
          %v1241 = vadd.f32 %v1237, %v1240
          %vm1242 = vweird.f32 %v1237
          %v1243 = vsel %vm1242, %v1237, %v1241
          %v1244 = vmul.f32 %v1236, %v1243
          %v1245 = vsub.f32 %v1233, %v1244
          %v1246 = vmul.f32 %v1245, %v1245
          %v1247 = vsel %vm782, %v1246, 0.0
          %1248 = vadd.xlane.f32.xlu0 %v1247
          %v1249 = vpop.xlane.xlu0 %1248
          %v1250 = vmul.f32 %v1249, %v1243
          %v1251 = vadd.f32 %v1250, 1e-05
          %v1252 = vrsqrt.pop %v1251
          %v1253 = vmul.f32 %v1252, %v1251
          %v1254 = vmul.f32 %v1253, %v1252
          %v1255 = vmul.f32 0.5, %v1254
          %v1256 = vsub.f32 1.5, %v1255
          %v1257 = vmul.f32 %v1252, %v1256
          %vm1258 = vweird.f32 %v1251
          %vm1259 = vweird.f32 %v1252
          %vm1260 = vmor %vm1258, %vm1259
          %v1261 = vsel %vm1260, %v1252, %v1257
          %v1262 = vmul.f32 %v1245, %v1261
          %v1263 = vld [vmem:[%s12] sm:$0x1]
          %v1265 = vperm.slane %v1263, 0
          %v1267 = vmul.f32 %v1262, %v1265
          %v1268 = vld [vmem:[%s13] sm:$0x1]
          %v1270 = vperm.slane %v1268, 0
          %v1272 = vadd.f32 %v1267, %v1270
          %1273 = vst.msk [vmem:[%s697] sm:$0xff] %vm782, %v1272
        $region116: #{tpu_custom_call.1} parent=75 // pred_fallthru
          _
        %s1274 = sand.u32 %s390, 1
        %s1275 = scalar_lea.sflag [#allocation8], %s1274
        %s1276 = sand.u32 %s390, 1
        %s1277 = smul.addr %s1276, 8
        %s1278 = scalar_lea.vmem [#allocation20], %s1277
        // Predicated region
        $region117: #{tpu_custom_call.1} parent=75 // pred_check
          %p1279 = pneg %p400
        $region118: #{tpu_custom_call.1} parent=75 // pred_check_branch
          %1281 = sbr.rel (%p1279) target = $region120
        $region119: #{tpu_custom_call.1} parent=75 // pred_region
          %1283 = vsyncadd %s1275, 0
          %s1284 = sadd.s32 %s45, %s44
          %s1285 = smul.addr %s1284, 8
          %s1286 = scalar_lea.hbm %s14, %s1285
          %s1288 = sshll.u32 %s1278, 4
          %s1289 = int_to_ptr.vmem [resolvable:$true] %s1288
          %s1290 = sshll.u32 %s1286, 4
          %s1291 = int_to_ptr.hbm [resolvable:$true] %s1290
          %1293 = dma.vmem_to_hbm [thread:$0]  %s1289, 128, %s1291, %s1275
        $region120: #{tpu_custom_call.1} parent=75 // pred_fallthru
          _
      $region76: #{tpu_custom_call.1} parent=5 // pred_fallthru
        _
      %p1294 = scmp.le.s32.totalorder 2, %s34
      // Predicated region
      $region121: #{tpu_custom_call.1} parent=5 // pred_check
        %p1295 = pneg %p1294
      $region122: #{tpu_custom_call.1} parent=5 // pred_check_branch
        %1297 = sbr.rel (%p1295) target = $region124
      $region123: #{tpu_custom_call.1} parent=5 // pred_region
        %s1298 = ssub.s32 %s34, 2
        // Predicated region
        $region125: #{tpu_custom_call.1} parent=123 // pred_check
          %p1299 = pneg %p406
        $region126: #{tpu_custom_call.1} parent=123 // pred_check_branch
          %1301 = sbr.rel (%p1299) target = $region128
        $region127: #{tpu_custom_call.1} parent=123 // pred_region
          %s1302 = sand.u32 %s391, 1
          %s1303 = scalar_lea.sflag [#allocation8], %s1302
          %s1304 = sand.u32 %s391, 1
          %s1305 = smul.addr %s1304, 8
          %s1306 = scalar_lea.vmem [#allocation20], %s1305
          %1308 = dma.done %s1303, 128
        $region128: #{tpu_custom_call.1} parent=123 // pred_fallthru
          _
      $region124: #{tpu_custom_call.1} parent=5 // pred_fallthru
        _
    $region6: #{tpu_custom_call.1} parent=1 // loop_footer
      %s38 = sadd.s32 1, %s34
    $region7: #{tpu_custom_call.1} parent=1 // loop_footer_branch
      %33 = sbr.rel target = $region3
    $region8: #{tpu_custom_call.1} parent=1 // loop_exit
      _
    %1309 = vsyncpa [#allocation7], 1
    %s1310 = scalar_lea.sflag [#allocation7], 1
    %1311 = vsyncpa %s1310, 1
    %1312 = vsyncpa [#allocation10], 1
    %s1313 = scalar_lea.sflag [#allocation10], 1
    %1314 = vsyncpa %s1313, 1
    %1315 = vsyncpa [#allocation13], 1
    %s1316 = scalar_lea.sflag [#allocation13], 1
    %1317 = vsyncpa %s1316, 1
    %1318 = vsyncpa [#allocation16], 1
    %1319 = vsyncpa [#allocation19], 1
    %1320 = vsyncpa [#allocation8], 1
    %s1321 = scalar_lea.sflag [#allocation8], 1
    %1322 = vsyncpa %s1321, 1

</llo_original>
